<compile_context>
chip_gen: v6e
topology: v6e:2x2x1
jax: 0.10.0
libtpu: 0.0.40
codegen_flags: <defaults>
</compile_context>

<pallas_src>
import jax
import jax.numpy as jnp
import numpy as np
from jax.experimental import pallas as pl
from jax.experimental.pallas import tpu as pltpu

NODE_NUM = 4
EDGES_NUM = 2
NUM_EDGES_TOTAL = NODE_NUM * EDGES_NUM  # 8


def _ncell_kernel(x0_ref, x1_ref, skip_ref,
                  w0_ref, b0_ref, w1_ref, b1_ref,
                  we_ref, bsum_ref, out_ref):
    """One (batch, spatial-tile) step of the fused cell.

    Weights arrive pre-binarized with BN gains folded in (bf16); biases are f32.
    All matmuls run bf16 x bf16 -> f32 on the MXU; everything else stays f32.
    Per tile: x* = (C_in, T); w = (C, C_in); we = (8, C, C); out = (Cout, T).
    """
    f32 = jnp.float32
    bf16 = jnp.bfloat16
    C = w0_ref.shape[0]

    # Preprocess 0 / 1: htanh -> 1x1 conv (+ folded BN gain) -> bias.
    a0 = jnp.clip(x0_ref[...], -1.0, 1.0).astype(bf16)
    a1 = jnp.clip(x1_ref[...], -1.0, 1.0).astype(bf16)
    s_prev2 = jnp.dot(w0_ref[...], a0, preferred_element_type=f32) + b0_ref[...]
    s_prev1 = jnp.dot(w1_ref[...], a1, preferred_element_type=f32) + b1_ref[...]

    # htanh of each state computed exactly once, carried as bf16 MXU operands.
    h_prev2 = jnp.clip(s_prev2, -1.0, 1.0).astype(bf16)
    h_prev1 = jnp.clip(s_prev1, -1.0, 1.0).astype(bf16)

    for i in range(NODE_NUM):
        # Node i = edge(2i)(state[-2]) + edge(2i+1)(state[-1]); biases pre-summed.
        s = (jnp.dot(we_ref[2 * i], h_prev2, preferred_element_type=f32)
             + jnp.dot(we_ref[2 * i + 1], h_prev1, preferred_element_type=f32)
             + bsum_ref[i])
        # Incremental, lane-dense store of this node's channel slice.  (If C is
        # not a multiple of 8 the store is masked but still correct.)
        out_ref[pl.ds(i * C, C), :] = s.astype(out_ref.dtype)
        if i < NODE_NUM - 1:
            h_prev2 = h_prev1
            h_prev1 = jnp.clip(s, -1.0, 1.0).astype(bf16)

    # Skip passthrough: direct copy into its output slice, no f32 round trip
    # (bit-exact when out dtype == skip dtype, which is the default).
    Cs = skip_ref.shape[0]
    out_ref[pl.ds(NODE_NUM * C, Cs), :] = skip_ref[...].astype(out_ref.dtype)


def _round_up(x, m):
    return ((x + m - 1) // m) * m


def _vmem_capacity_bytes():
    try:
        info = pltpu.get_tpu_info()
        cap = int(getattr(info, "vmem_capacity_bytes", 64 * 2**20))
        if cap <= 0:
            cap = 64 * 2**20
        return cap
    except Exception:
        return 64 * 2**20  # conservative (v7x-class)


def _choose_tiling(HW, N, max_tile_hw, need_bytes_fn, vmem_budget):
    """Pick a lane tile (always a multiple of 128) and the padded HW it divides."""
    hw128 = _round_up(max(HW, 1), 128)
    cap = max(128, min((max_tile_hw // 128) * 128, hw128))

    tile = 128
    # Prefer the largest 128-multiple divisor of hw128 that fits the VMEM budget.
    for t in range(cap, 127, -128):
        if hw128 % t == 0 and need_bytes_fn(t) <= vmem_budget:
            tile = t
            break
    else:
        # No clean divisor fits: largest 128-multiple that fits; pad HW further.
        for t in range(cap, 127, -128):
            if need_bytes_fn(t) <= vmem_budget:
                tile = t
                break

    # Guarantee >= 2 grid steps so both v7x TensorCores get work.
    while N * (_round_up(hw128, tile) // tile) < 2 and tile > 128:
        tile = max(128, ((tile // 2) // 128) * 128)

    hw_pad = _round_up(hw128, tile)
    return tile, hw_pad


def ncell_forward(input0, input1, skip_input, params, *,
                  max_tile_hw=None, act_dtype=None):
    """Returns (cat([n1..n4, skip_input], channel), skip_input) like NCell.forward."""
    N, Cpp, H, W = input0.shape
    Cp = input1.shape[1]
    Cs = skip_input.shape[1]
    C = params["w0"].shape[0]
    Cout = NODE_NUM * C + Cs
    HW = H * W

    # Activations / outputs keep the input dtype by default (exact skip
    # passthrough; avoids half-packed bf16 vregs at small C on v5e).  A bf16
    # pipeline can pass act_dtype=jnp.bfloat16 explicitly.
    if act_dtype is None:
        act_dtype = input0.dtype
    act_dtype = jnp.dtype(act_dtype)
    act_b = act_dtype.itemsize

    vmem_cap = _vmem_capacity_bytes()
    vmem_budget = int(0.75 * vmem_cap)
    if max_tile_hw is None:
        # Smaller default tile on 64 MiB (v7x-class) parts.
        max_tile_hw = 1024 if vmem_cap <= (64 * 2**20) else 2048

    def need_bytes(t):
        # Double-buffered activation I/O tiles.
        io = 2 * (Cpp + Cp + Cs + Cout) * t * act_b
        # Weights (bf16) + biases (f32); counted double-buffered (conservative).
        w = 2 * 2 * (C * Cpp + C * Cp + NUM_EDGES_TOTAL * C * C)
        b = 2 * 4 * (2 * C + NODE_NUM * C)
        # In-kernel working set (a0/a1, live states, matmul results) — f32-sized.
        work = (2 * (Cpp + Cp) + 10 * C + Cout) * t * 4
        return io + w + b + work

    tile_hw, hw_pad = _choose_tiling(HW, N, max_tile_hw, need_bytes, vmem_budget)
    vmem_limit = int(min(vmem_budget, max(32 * 2**20, need_bytes(tile_hw) + (4 << 20))))

    # NCHW -> (N, C, H*W): pure reshape; pad the spatial axis once to a multiple
    # of the lane tile (padded lanes are sliced off after the kernel).
    def prep(x):
        x = x.reshape(x.shape[0], x.shape[1], HW).astype(act_dtype)
        if hw_pad != HW:
            x = jnp.pad(x, ((0, 0), (0, 0), (0, hw_pad - HW)))
        return x

    x0 = prep(input0)
    x1 = prep(input1)
    sk = prep(skip_input)

    # ---- Weight prep: hoisted, weight-invariant work (done once, not per tile) ----
    # Fold BN gains into weight rows:  g * (W @ x) == (diag(g) W) @ x.   MXU gets bf16.
    w0f = (params["w0"] * params["g0"][:, None]).astype(jnp.bfloat16)        # (C, Cpp)
    w1f = (params["w1"] * params["g1"][:, None]).astype(jnp.bfloat16)        # (C, Cp)
    b0 = params["b0"].reshape(C, 1).astype(jnp.float32)
    b1 = params["b1"].reshape(C, 1).astype(jnp.float32)
    # XNOR-style binarization of edge weights + edge BN gain folding.
    we = params["we"]                                                        # (8, C, C)
    alpha = jnp.mean(jnp.abs(we), axis=2, keepdims=True)                     # per out-filter
    wbf = (jnp.where(we >= 0, 1.0, -1.0) * alpha
           * params["ge"][:, :, None]).astype(jnp.bfloat16)                  # (8, C, C)
    # Per-node bias = be(2i) + be(2i+1).
    bsum = (params["be"][0::2] + params["be"][1::2])[:, :, None].astype(jnp.float32)

    grid = (N, hw_pad // tile_hw)

    out_ncl = pl.pallas_call(
        _ncell_kernel,
        out_shape=jax.ShapeDtypeStruct((N, Cout, hw_pad), act_dtype),
        grid_spec=pltpu.PrefetchScalarGridSpec(
            num_scalar_prefetch=0,
            grid=grid,
            in_specs=[
                pl.BlockSpec((None, Cpp, tile_hw), lambda n, t: (n, 0, t)),
                pl.BlockSpec((None, Cp, tile_hw), lambda n, t: (n, 0, t)),
                pl.BlockSpec((None, Cs, tile_hw), lambda n, t: (n, 0, t)),
                pl.BlockSpec((C, Cpp), lambda n, t: (0, 0)),
                pl.BlockSpec((C, 1), lambda n, t: (0, 0)),
                pl.BlockSpec((C, Cp), lambda n, t: (0, 0)),
                pl.BlockSpec((C, 1), lambda n, t: (0, 0)),
                pl.BlockSpec((NUM_EDGES_TOTAL, C, C), lambda n, t: (0, 0, 0)),
                pl.BlockSpec((NODE_NUM, C, 1), lambda n, t: (0, 0, 0)),
            ],
            out_specs=pl.BlockSpec((None, Cout, tile_hw), lambda n, t: (n, 0, t)),
        ),
        compiler_params=pltpu.CompilerParams(
            dimension_semantics=("parallel", "parallel"),
            vmem_limit_bytes=vmem_limit),
    )(x0, x1, sk, w0f, b0, w1f, b1, wbf, bsum)

    if hw_pad != HW:
        out_ncl = out_ncl[:, :, :HW]
    out = out_ncl.reshape(N, Cout, H, W)   # pure reshape back to NCHW
    return out, skip_input


def ncell_reference(input0, input1, skip_input, params):
    """Pure-JAX f32 reference with identical math, for correctness checking."""
    N, Cpp, H, W = input0.shape
    HW = H * W
    x0 = input0.reshape(N, Cpp, HW).astype(jnp.float32)
    x1 = input1.reshape(N, input1.shape[1], HW).astype(jnp.float32)
    sk = skip_input.reshape(N, skip_input.shape[1], HW).astype(jnp.float32)

    def htanh(x):
        return jnp.clip(x, -1.0, 1.0)

    def pre(x, w, g, b):
        return g[:, None] * jnp.einsum("oc,ncl->nol", w, htanh(x)) + b[:, None]

    def edge(h, idx):
        w = params["we"][idx]
        alpha = jnp.mean(jnp.abs(w), axis=1, keepdims=True)
        wb = jnp.where(w >= 0, 1.0, -1.0) * alpha
        return (params["ge"][idx][:, None] * jnp.einsum("oc,ncl->nol", wb, htanh(h))
                + params["be"][idx][:, None])

    s0 = pre(x0, params["w0"], params["g0"], params["b0"])
    s1 = pre(x1, params["w1"], params["g1"], params["b1"])
    states = [s0, s1]
    off = 0
    for _ in range(NODE_NUM):
        s = edge(states[-2], off) + edge(states[-1], off + 1)
        off += EDGES_NUM
        states.append(s)
    out = jnp.concatenate(states[2:] + [sk], axis=1)
    return out.reshape(N, -1, H, W), skip_input


def init_params(key, C, C_prev_prev, C_prev):
    ks = jax.random.split(key, 9)
    return {
        "w0": 0.1 * jax.random.normal(ks[0], (C, C_prev_prev), jnp.float32),
        "w1": 0.1 * jax.random.normal(ks[1], (C, C_prev), jnp.float32),
        "we": 0.1 * jax.random.normal(ks[2], (NUM_EDGES_TOTAL, C, C), jnp.float32),
        "g0": 1.0 + 0.1 * jax.random.normal(ks[3], (C,), jnp.float32),
        "b0": 0.05 * jax.random.normal(ks[4], (C,), jnp.float32),
        "g1": 1.0 + 0.1 * jax.random.normal(ks[5], (C,), jnp.float32),
        "b1": 0.05 * jax.random.normal(ks[6], (C,), jnp.float32),
        "ge": 1.0 + 0.1 * jax.random.normal(ks[7], (NUM_EDGES_TOTAL, C), jnp.float32),
        "be": 0.05 * jax.random.normal(ks[8], (NUM_EDGES_TOTAL, C), jnp.float32),
    }


if __name__ == "__main__":
    N, H, W = 2, 16, 16
    C, C_prev_prev, C_prev, C_skip = 8, 8, 8, 8

    root = jax.random.PRNGKey(0)
    k0, k1, k2, kp = jax.random.split(root, 4)
    input0 = jax.random.normal(k0, (N, C_prev_prev, H, W), jnp.float32)
    input1 = jax.random.normal(k1, (N, C_prev, H, W), jnp.float32)
    skip_input = jax.random.normal(k2, (N, C_skip, H, W), jnp.float32)
    params = init_params(kp, C, C_prev_prev, C_prev)

    out, skip_out = ncell_forward(input0, input1, skip_input, params)
    out = jax.block_until_ready(out)
    skip_out = jax.block_until_ready(skip_out)

    ref_out, ref_skip = ncell_reference(input0, input1, skip_input, params)

    # Node channels: f32 reference vs bf16-MXU kernel.
    np.testing.assert_allclose(np.asarray(out[:, :NODE_NUM * C].astype(jnp.float32)),
                               np.asarray(ref_out[:, :NODE_NUM * C]),
                               rtol=5e-2, atol=5e-2)
    # Skip channels inside the concat are an exact passthrough (no f32<->bf16 trip).
    np.testing.assert_array_equal(np.asarray(out[:, NODE_NUM * C:]),
                                  np.asarray(skip_input))
    # Returned skip is the untouched input.
    np.testing.assert_array_equal(np.asarray(skip_out), np.asarray(skip_input))
    assert out.shape == (N, NODE_NUM * C + C_skip, H, W)

    print("KERNEL_OK")
</pallas_src>

<mosaic_0001>
module attributes {stable_mosaic.version = 11 : i64} {
  func.func @_ncell_kernel(%arg0: i32, %arg1: i32, %arg2: memref<1x8x256xf32, #tpu.memory_space<vmem>>, %arg3: memref<1x8x256xf32, #tpu.memory_space<vmem>>, %arg4: memref<1x8x256xf32, #tpu.memory_space<vmem>>, %arg5: memref<8x8xbf16, #tpu.memory_space<vmem>>, %arg6: memref<8x1xf32, #tpu.memory_space<vmem>>, %arg7: memref<8x8xbf16, #tpu.memory_space<vmem>>, %arg8: memref<8x1xf32, #tpu.memory_space<vmem>>, %arg9: memref<8x8x8xbf16, #tpu.memory_space<vmem>>, %arg10: memref<4x8x1xf32, #tpu.memory_space<vmem>>, %arg11: memref<1x40x256xf32, #tpu.memory_space<vmem>>) attributes {dimension_semantics = [#tpu.dimension_semantics<parallel>, #tpu.dimension_semantics<parallel>], iteration_bounds = array<i64: 2, 1>, scalar_prefetch = 0 : i64, scratch_operands = 0 : i64, tpu.core_type = #tpu.core_type<tc>, window_params = [{transform_indices = @transform_0, window_bounds = array<i64: 1, 8, 256>}, {transform_indices = @transform_1, window_bounds = array<i64: 1, 8, 256>}, {transform_indices = @transform_2, window_bounds = array<i64: 1, 8, 256>}, {pipeline_mode = #tpu.pipeline_mode<synchronous>, transform_indices = @transform_3, window_bounds = array<i64: 8, 8>}, {pipeline_mode = #tpu.pipeline_mode<synchronous>, transform_indices = @transform_4, window_bounds = array<i64: 8, 1>}, {pipeline_mode = #tpu.pipeline_mode<synchronous>, transform_indices = @transform_5, window_bounds = array<i64: 8, 8>}, {pipeline_mode = #tpu.pipeline_mode<synchronous>, transform_indices = @transform_6, window_bounds = array<i64: 8, 1>}, {pipeline_mode = #tpu.pipeline_mode<synchronous>, transform_indices = @transform_7, window_bounds = array<i64: 8, 8, 8>}, {pipeline_mode = #tpu.pipeline_mode<synchronous>, transform_indices = @transform_8, window_bounds = array<i64: 4, 8, 1>}, {transform_indices = @transform_9, window_bounds = array<i64: 1, 40, 256>}]} {
    %c0 = arith.constant 0 : index
    %c0_0 = arith.constant 0 : index
    %c0_1 = arith.constant 0 : index
    %0 = vector.load %arg2[%c0, %c0_0, %c0_1] : memref<1x8x256xf32, #tpu.memory_space<vmem>>, vector<1x8x256xf32>
    %1 = vector.shape_cast %0 : vector<1x8x256xf32> to vector<8x256xf32>
    %cst = arith.constant -1.000000e+00 : f32
    %cst_2 = arith.constant 1.000000e+00 : f32
    %2 = vector.broadcast %cst : f32 to vector<8x256xf32>
    %3 = arith.maximumf %2, %1 : vector<8x256xf32>
    %4 = vector.broadcast %cst_2 : f32 to vector<8x256xf32>
    %5 = arith.minimumf %4, %3 : vector<8x256xf32>
    %6 = arith.truncf %5 : vector<8x256xf32> to vector<8x256xbf16>
    %c0_3 = arith.constant 0 : index
    %c0_4 = arith.constant 0 : index
    %c0_5 = arith.constant 0 : index
    %7 = vector.load %arg3[%c0_3, %c0_4, %c0_5] : memref<1x8x256xf32, #tpu.memory_space<vmem>>, vector<1x8x256xf32>
    %8 = vector.shape_cast %7 : vector<1x8x256xf32> to vector<8x256xf32>
    %cst_6 = arith.constant -1.000000e+00 : f32
    %cst_7 = arith.constant 1.000000e+00 : f32
    %9 = vector.broadcast %cst_6 : f32 to vector<8x256xf32>
    %10 = arith.maximumf %9, %8 : vector<8x256xf32>
    %11 = vector.broadcast %cst_7 : f32 to vector<8x256xf32>
    %12 = arith.minimumf %11, %10 : vector<8x256xf32>
    %13 = arith.truncf %12 : vector<8x256xf32> to vector<8x256xbf16>
    %c0_8 = arith.constant 0 : index
    %c0_9 = arith.constant 0 : index
    %14 = vector.load %arg5[%c0_8, %c0_9] : memref<8x8xbf16, #tpu.memory_space<vmem>>, vector<8x8xbf16>
    %cst_10 = arith.constant dense<0.000000e+00> : vector<8x256xf32>
    %15 = tpu.matmul %14, %6, %cst_10 {dimension_numbers = #tpu.dot_dimension_numbers<[1], [0], [0], [1], [0, 0, 1, 1], [], []>} : vector<8x8xbf16>, vector<8x256xbf16>, vector<8x256xf32> -> vector<8x256xf32>
    %c0_11 = arith.constant 0 : index
    %c0_12 = arith.constant 0 : index
    %16 = vector.load %arg6[%c0_11, %c0_12] : memref<8x1xf32, #tpu.memory_space<vmem>>, vector<8x1xf32>
    %17 = vector.broadcast %16 : vector<8x1xf32> to vector<8x256xf32>
    %18 = arith.addf %15, %17 : vector<8x256xf32>
    %c0_13 = arith.constant 0 : index
    %c0_14 = arith.constant 0 : index
    %19 = vector.load %arg7[%c0_13, %c0_14] : memref<8x8xbf16, #tpu.memory_space<vmem>>, vector<8x8xbf16>
    %cst_15 = arith.constant dense<0.000000e+00> : vector<8x256xf32>
    %20 = tpu.matmul %19, %13, %cst_15 {dimension_numbers = #tpu.dot_dimension_numbers<[1], [0], [0], [1], [0, 0, 1, 1], [], []>} : vector<8x8xbf16>, vector<8x256xbf16>, vector<8x256xf32> -> vector<8x256xf32>
    %c0_16 = arith.constant 0 : index
    %c0_17 = arith.constant 0 : index
    %21 = vector.load %arg8[%c0_16, %c0_17] : memref<8x1xf32, #tpu.memory_space<vmem>>, vector<8x1xf32>
    %22 = vector.broadcast %21 : vector<8x1xf32> to vector<8x256xf32>
    %23 = arith.addf %20, %22 : vector<8x256xf32>
    %cst_18 = arith.constant -1.000000e+00 : f32
    %cst_19 = arith.constant 1.000000e+00 : f32
    %24 = vector.broadcast %cst_18 : f32 to vector<8x256xf32>
    %25 = arith.maximumf %24, %18 : vector<8x256xf32>
    %26 = vector.broadcast %cst_19 : f32 to vector<8x256xf32>
    %27 = arith.minimumf %26, %25 : vector<8x256xf32>
    %28 = arith.truncf %27 : vector<8x256xf32> to vector<8x256xbf16>
    %cst_20 = arith.constant -1.000000e+00 : f32
    %cst_21 = arith.constant 1.000000e+00 : f32
    %29 = vector.broadcast %cst_20 : f32 to vector<8x256xf32>
    %30 = arith.maximumf %29, %23 : vector<8x256xf32>
    %31 = vector.broadcast %cst_21 : f32 to vector<8x256xf32>
    %32 = arith.minimumf %31, %30 : vector<8x256xf32>
    %33 = arith.truncf %32 : vector<8x256xf32> to vector<8x256xbf16>
    %c0_22 = arith.constant 0 : index
    %c0_23 = arith.constant 0 : index
    %c0_24 = arith.constant 0 : index
    %34 = vector.load %arg9[%c0_22, %c0_23, %c0_24] : memref<8x8x8xbf16, #tpu.memory_space<vmem>>, vector<1x8x8xbf16>
    %35 = vector.shape_cast %34 : vector<1x8x8xbf16> to vector<8x8xbf16>
    %cst_25 = arith.constant dense<0.000000e+00> : vector<8x256xf32>
    %36 = tpu.matmul %35, %28, %cst_25 {dimension_numbers = #tpu.dot_dimension_numbers<[1], [0], [0], [1], [0, 0, 1, 1], [], []>} : vector<8x8xbf16>, vector<8x256xbf16>, vector<8x256xf32> -> vector<8x256xf32>
    %c1 = arith.constant 1 : index
    %c0_26 = arith.constant 0 : index
    %c0_27 = arith.constant 0 : index
    %37 = vector.load %arg9[%c1, %c0_26, %c0_27] : memref<8x8x8xbf16, #tpu.memory_space<vmem>>, vector<1x8x8xbf16>
    %38 = vector.shape_cast %37 : vector<1x8x8xbf16> to vector<8x8xbf16>
    %cst_28 = arith.constant dense<0.000000e+00> : vector<8x256xf32>
    %39 = tpu.matmul %38, %33, %cst_28 {dimension_numbers = #tpu.dot_dimension_numbers<[1], [0], [0], [1], [0, 0, 1, 1], [], []>} : vector<8x8xbf16>, vector<8x256xbf16>, vector<8x256xf32> -> vector<8x256xf32>
    %40 = arith.addf %36, %39 : vector<8x256xf32>
    %c0_29 = arith.constant 0 : index
    %c0_30 = arith.constant 0 : index
    %c0_31 = arith.constant 0 : index
    %41 = vector.load %arg10[%c0_29, %c0_30, %c0_31] : memref<4x8x1xf32, #tpu.memory_space<vmem>>, vector<1x8x1xf32>
    %42 = vector.shape_cast %41 : vector<1x8x1xf32> to vector<8x1xf32>
    %43 = vector.broadcast %42 : vector<8x1xf32> to vector<8x256xf32>
    %44 = arith.addf %40, %43 : vector<8x256xf32>
    %c0_32 = arith.constant 0 : index
    %c0_33 = arith.constant 0 : index
    %c0_34 = arith.constant 0 : index
    %45 = vector.load %arg11[%c0_32, %c0_33, %c0_34] : memref<1x40x256xf32, #tpu.memory_space<vmem>>, vector<1x8x256xf32>
    %46 = vector.shape_cast %45 : vector<1x8x256xf32> to vector<8x256xf32>
    %47 = vector.shape_cast %44 : vector<8x256xf32> to vector<1x8x256xf32>
    tpu.vector_store %arg11[%c0_32, %c0_33, %c0_34], %47 {strides = array<i32>} : memref<1x40x256xf32, #tpu.memory_space<vmem>>, vector<1x8x256xf32>,
    %cst_35 = arith.constant -1.000000e+00 : f32
    %cst_36 = arith.constant 1.000000e+00 : f32
    %48 = vector.broadcast %cst_35 : f32 to vector<8x256xf32>
    %49 = arith.maximumf %48, %44 : vector<8x256xf32>
    %50 = vector.broadcast %cst_36 : f32 to vector<8x256xf32>
    %51 = arith.minimumf %50, %49 : vector<8x256xf32>
    %52 = arith.truncf %51 : vector<8x256xf32> to vector<8x256xbf16>
    %c2 = arith.constant 2 : index
    %c0_37 = arith.constant 0 : index
    %c0_38 = arith.constant 0 : index
    %53 = vector.load %arg9[%c2, %c0_37, %c0_38] : memref<8x8x8xbf16, #tpu.memory_space<vmem>>, vector<1x8x8xbf16>
    %54 = vector.shape_cast %53 : vector<1x8x8xbf16> to vector<8x8xbf16>
    %cst_39 = arith.constant dense<0.000000e+00> : vector<8x256xf32>
    %55 = tpu.matmul %54, %33, %cst_39 {dimension_numbers = #tpu.dot_dimension_numbers<[1], [0], [0], [1], [0, 0, 1, 1], [], []>} : vector<8x8xbf16>, vector<8x256xbf16>, vector<8x256xf32> -> vector<8x256xf32>
    %c3 = arith.constant 3 : index
    %c0_40 = arith.constant 0 : index
    %c0_41 = arith.constant 0 : index
    %56 = vector.load %arg9[%c3, %c0_40, %c0_41] : memref<8x8x8xbf16, #tpu.memory_space<vmem>>, vector<1x8x8xbf16>
    %57 = vector.shape_cast %56 : vector<1x8x8xbf16> to vector<8x8xbf16>
    %cst_42 = arith.constant dense<0.000000e+00> : vector<8x256xf32>
    %58 = tpu.matmul %57, %52, %cst_42 {dimension_numbers = #tpu.dot_dimension_numbers<[1], [0], [0], [1], [0, 0, 1, 1], [], []>} : vector<8x8xbf16>, vector<8x256xbf16>, vector<8x256xf32> -> vector<8x256xf32>
    %59 = arith.addf %55, %58 : vector<8x256xf32>
    %c1_43 = arith.constant 1 : index
    %c0_44 = arith.constant 0 : index
    %c0_45 = arith.constant 0 : index
    %60 = vector.load %arg10[%c1_43, %c0_44, %c0_45] : memref<4x8x1xf32, #tpu.memory_space<vmem>>, vector<1x8x1xf32>
    %61 = vector.shape_cast %60 : vector<1x8x1xf32> to vector<8x1xf32>
    %62 = vector.broadcast %61 : vector<8x1xf32> to vector<8x256xf32>
    %63 = arith.addf %59, %62 : vector<8x256xf32>
    %c0_46 = arith.constant 0 : index
    %c8 = arith.constant 8 : index
    %c0_47 = arith.constant 0 : index
    %64 = vector.load %arg11[%c0_46, %c8, %c0_47] : memref<1x40x256xf32, #tpu.memory_space<vmem>>, vector<1x8x256xf32>
    %65 = vector.shape_cast %64 : vector<1x8x256xf32> to vector<8x256xf32>
    %66 = vector.shape_cast %63 : vector<8x256xf32> to vector<1x8x256xf32>
    tpu.vector_store %arg11[%c0_46, %c8, %c0_47], %66 {strides = array<i32>} : memref<1x40x256xf32, #tpu.memory_space<vmem>>, vector<1x8x256xf32>,
    %cst_48 = arith.constant -1.000000e+00 : f32
    %cst_49 = arith.constant 1.000000e+00 : f32
    %67 = vector.broadcast %cst_48 : f32 to vector<8x256xf32>
    %68 = arith.maximumf %67, %63 : vector<8x256xf32>
    %69 = vector.broadcast %cst_49 : f32 to vector<8x256xf32>
    %70 = arith.minimumf %69, %68 : vector<8x256xf32>
    %71 = arith.truncf %70 : vector<8x256xf32> to vector<8x256xbf16>
    %c4 = arith.constant 4 : index
    %c0_50 = arith.constant 0 : index
    %c0_51 = arith.constant 0 : index
    %72 = vector.load %arg9[%c4, %c0_50, %c0_51] : memref<8x8x8xbf16, #tpu.memory_space<vmem>>, vector<1x8x8xbf16>
    %73 = vector.shape_cast %72 : vector<1x8x8xbf16> to vector<8x8xbf16>
    %cst_52 = arith.constant dense<0.000000e+00> : vector<8x256xf32>
    %74 = tpu.matmul %73, %52, %cst_52 {dimension_numbers = #tpu.dot_dimension_numbers<[1], [0], [0], [1], [0, 0, 1, 1], [], []>} : vector<8x8xbf16>, vector<8x256xbf16>, vector<8x256xf32> -> vector<8x256xf32>
    %c5 = arith.constant 5 : index
    %c0_53 = arith.constant 0 : index
    %c0_54 = arith.constant 0 : index
    %75 = vector.load %arg9[%c5, %c0_53, %c0_54] : memref<8x8x8xbf16, #tpu.memory_space<vmem>>, vector<1x8x8xbf16>
    %76 = vector.shape_cast %75 : vector<1x8x8xbf16> to vector<8x8xbf16>
    %cst_55 = arith.constant dense<0.000000e+00> : vector<8x256xf32>
    %77 = tpu.matmul %76, %71, %cst_55 {dimension_numbers = #tpu.dot_dimension_numbers<[1], [0], [0], [1], [0, 0, 1, 1], [], []>} : vector<8x8xbf16>, vector<8x256xbf16>, vector<8x256xf32> -> vector<8x256xf32>
    %78 = arith.addf %74, %77 : vector<8x256xf32>
    %c2_56 = arith.constant 2 : index
    %c0_57 = arith.constant 0 : index
    %c0_58 = arith.constant 0 : index
    %79 = vector.load %arg10[%c2_56, %c0_57, %c0_58] : memref<4x8x1xf32, #tpu.memory_space<vmem>>, vector<1x8x1xf32>
    %80 = vector.shape_cast %79 : vector<1x8x1xf32> to vector<8x1xf32>
    %81 = vector.broadcast %80 : vector<8x1xf32> to vector<8x256xf32>
    %82 = arith.addf %78, %81 : vector<8x256xf32>
    %c0_59 = arith.constant 0 : index
    %c16 = arith.constant 16 : index
    %c0_60 = arith.constant 0 : index
    %83 = vector.load %arg11[%c0_59, %c16, %c0_60] : memref<1x40x256xf32, #tpu.memory_space<vmem>>, vector<1x8x256xf32>
    %84 = vector.shape_cast %83 : vector<1x8x256xf32> to vector<8x256xf32>
    %85 = vector.shape_cast %82 : vector<8x256xf32> to vector<1x8x256xf32>
    tpu.vector_store %arg11[%c0_59, %c16, %c0_60], %85 {strides = array<i32>} : memref<1x40x256xf32, #tpu.memory_space<vmem>>, vector<1x8x256xf32>,
    %cst_61 = arith.constant -1.000000e+00 : f32
    %cst_62 = arith.constant 1.000000e+00 : f32
    %86 = vector.broadcast %cst_61 : f32 to vector<8x256xf32>
    %87 = arith.maximumf %86, %82 : vector<8x256xf32>
    %88 = vector.broadcast %cst_62 : f32 to vector<8x256xf32>
    %89 = arith.minimumf %88, %87 : vector<8x256xf32>
    %90 = arith.truncf %89 : vector<8x256xf32> to vector<8x256xbf16>
    %c6 = arith.constant 6 : index
    %c0_63 = arith.constant 0 : index
    %c0_64 = arith.constant 0 : index
    %91 = vector.load %arg9[%c6, %c0_63, %c0_64] : memref<8x8x8xbf16, #tpu.memory_space<vmem>>, vector<1x8x8xbf16>
    %92 = vector.shape_cast %91 : vector<1x8x8xbf16> to vector<8x8xbf16>
    %cst_65 = arith.constant dense<0.000000e+00> : vector<8x256xf32>
    %93 = tpu.matmul %92, %71, %cst_65 {dimension_numbers = #tpu.dot_dimension_numbers<[1], [0], [0], [1], [0, 0, 1, 1], [], []>} : vector<8x8xbf16>, vector<8x256xbf16>, vector<8x256xf32> -> vector<8x256xf32>
    %c7 = arith.constant 7 : index
    %c0_66 = arith.constant 0 : index
    %c0_67 = arith.constant 0 : index
    %94 = vector.load %arg9[%c7, %c0_66, %c0_67] : memref<8x8x8xbf16, #tpu.memory_space<vmem>>, vector<1x8x8xbf16>
    %95 = vector.shape_cast %94 : vector<1x8x8xbf16> to vector<8x8xbf16>
    %cst_68 = arith.constant dense<0.000000e+00> : vector<8x256xf32>
    %96 = tpu.matmul %95, %90, %cst_68 {dimension_numbers = #tpu.dot_dimension_numbers<[1], [0], [0], [1], [0, 0, 1, 1], [], []>} : vector<8x8xbf16>, vector<8x256xbf16>, vector<8x256xf32> -> vector<8x256xf32>
    %97 = arith.addf %93, %96 : vector<8x256xf32>
    %c3_69 = arith.constant 3 : index
    %c0_70 = arith.constant 0 : index
    %c0_71 = arith.constant 0 : index
    %98 = vector.load %arg10[%c3_69, %c0_70, %c0_71] : memref<4x8x1xf32, #tpu.memory_space<vmem>>, vector<1x8x1xf32>
    %99 = vector.shape_cast %98 : vector<1x8x1xf32> to vector<8x1xf32>
    %100 = vector.broadcast %99 : vector<8x1xf32> to vector<8x256xf32>
    %101 = arith.addf %97, %100 : vector<8x256xf32>
    %c0_72 = arith.constant 0 : index
    %c24 = arith.constant 24 : index
    %c0_73 = arith.constant 0 : index
    %102 = vector.load %arg11[%c0_72, %c24, %c0_73] : memref<1x40x256xf32, #tpu.memory_space<vmem>>, vector<1x8x256xf32>
    %103 = vector.shape_cast %102 : vector<1x8x256xf32> to vector<8x256xf32>
    %104 = vector.shape_cast %101 : vector<8x256xf32> to vector<1x8x256xf32>
    tpu.vector_store %arg11[%c0_72, %c24, %c0_73], %104 {strides = array<i32>} : memref<1x40x256xf32, #tpu.memory_space<vmem>>, vector<1x8x256xf32>,
    %c0_74 = arith.constant 0 : index
    %c0_75 = arith.constant 0 : index
    %c0_76 = arith.constant 0 : index
    %105 = vector.load %arg4[%c0_74, %c0_75, %c0_76] : memref<1x8x256xf32, #tpu.memory_space<vmem>>, vector<1x8x256xf32>
    %106 = vector.shape_cast %105 : vector<1x8x256xf32> to vector<8x256xf32>
    %c0_77 = arith.constant 0 : index
    %c32 = arith.constant 32 : index
    %c0_78 = arith.constant 0 : index
    %107 = vector.load %arg11[%c0_77, %c32, %c0_78] : memref<1x40x256xf32, #tpu.memory_space<vmem>>, vector<1x8x256xf32>
    %108 = vector.shape_cast %107 : vector<1x8x256xf32> to vector<8x256xf32>
    %109 = vector.shape_cast %106 : vector<8x256xf32> to vector<1x8x256xf32>
    tpu.vector_store %arg11[%c0_77, %c32, %c0_78], %109 {strides = array<i32>} : memref<1x40x256xf32, #tpu.memory_space<vmem>>, vector<1x8x256xf32>,
    return
  }
  func.func @transform_0(%arg0: i32, %arg1: i32) -> (i32, i32, i32) {
    %c0_i32 = arith.constant 0 : i32
    %c0_i32_0 = arith.constant 0 : i32
    return %arg0, %c0_i32, %arg1 : i32, i32, i32
  }
  func.func @transform_1(%arg0: i32, %arg1: i32) -> (i32, i32, i32) {
    %c0_i32 = arith.constant 0 : i32
    %c0_i32_0 = arith.constant 0 : i32
    return %arg0, %c0_i32, %arg1 : i32, i32, i32
  }
  func.func @transform_2(%arg0: i32, %arg1: i32) -> (i32, i32, i32) {
    %c0_i32 = arith.constant 0 : i32
    %c0_i32_0 = arith.constant 0 : i32
    return %arg0, %c0_i32, %arg1 : i32, i32, i32
  }
  func.func @transform_3(%arg0: i32, %arg1: i32) -> (i32, i32) {
    %c0_i32 = arith.constant 0 : i32
    %c0_i32_0 = arith.constant 0 : i32
    %c0_i32_1 = arith.constant 0 : i32
    return %c0_i32, %c0_i32_0 : i32, i32
  }
  func.func @transform_4(%arg0: i32, %arg1: i32) -> (i32, i32) {
    %c0_i32 = arith.constant 0 : i32
    %c0_i32_0 = arith.constant 0 : i32
    %c0_i32_1 = arith.constant 0 : i32
    return %c0_i32, %c0_i32_0 : i32, i32
  }
  func.func @transform_5(%arg0: i32, %arg1: i32) -> (i32, i32) {
    %c0_i32 = arith.constant 0 : i32
    %c0_i32_0 = arith.constant 0 : i32
    %c0_i32_1 = arith.constant 0 : i32
    return %c0_i32, %c0_i32_0 : i32, i32
  }
  func.func @transform_6(%arg0: i32, %arg1: i32) -> (i32, i32) {
    %c0_i32 = arith.constant 0 : i32
    %c0_i32_0 = arith.constant 0 : i32
    %c0_i32_1 = arith.constant 0 : i32
    return %c0_i32, %c0_i32_0 : i32, i32
  }
  func.func @transform_7(%arg0: i32, %arg1: i32) -> (i32, i32, i32) {
    %c0_i32 = arith.constant 0 : i32
    %c0_i32_0 = arith.constant 0 : i32
    %c0_i32_1 = arith.constant 0 : i32
    %c0_i32_2 = arith.constant 0 : i32
    return %c0_i32, %c0_i32_0, %c0_i32_1 : i32, i32, i32
  }
  func.func @transform_8(%arg0: i32, %arg1: i32) -> (i32, i32, i32) {
    %c0_i32 = arith.constant 0 : i32
    %c0_i32_0 = arith.constant 0 : i32
    %c0_i32_1 = arith.constant 0 : i32
    %c0_i32_2 = arith.constant 0 : i32
    return %c0_i32, %c0_i32_0, %c0_i32_1 : i32, i32, i32
  }
  func.func @transform_9(%arg0: i32, %arg1: i32) -> (i32, i32, i32) {
    %c0_i32 = arith.constant 0 : i32
    %c0_i32_0 = arith.constant 0 : i32
    return %arg0, %c0_i32, %arg1 : i32, i32, i32
  }
}

</mosaic_0001>

<llo_original>
// kernel: tpu_custom_call.1
$region0: #{tpu_custom_call.1}
  #allocation0 [shape = 'u32[]', space=smem, size = 0x4, offset = 0x4, fixed_abs, tag = 'smem constant byte address 0x4 - core index']
  #allocation1 [shape = 'u32[144,128]{1,0:T(1,128)}', space=vmem, size = 0x12000, scoped, tag = 'internal scratch']
  %s0 = inlined_call_operand.vmem [shape: f32[2,8,256], index: 0, kind: input, shape index: {}]
  %s1 = inlined_call_operand.hbm [shape: f32[2,8,256], index: 1, kind: input, shape index: {}]
  %s2 = inlined_call_operand.hbm [shape: f32[2,8,256], index: 2, kind: input, shape index: {}]
  %s3 = inlined_call_operand.hbm [shape: bf16[8,8], index: 3, kind: input, shape index: {}]
  %s4 = inlined_call_operand.vmem [shape: f32[8,1], index: 4, kind: input, shape index: {}]
  %s5 = inlined_call_operand.hbm [shape: bf16[8,8], index: 5, kind: input, shape index: {}]
  %s6 = inlined_call_operand.vmem [shape: f32[8,1], index: 6, kind: input, shape index: {}]
  %s7 = inlined_call_operand.vmem [shape: bf16[8,8,8], index: 7, kind: input, shape index: {}]
  %s8 = inlined_call_operand.vmem [shape: f32[4,8,1], index: 8, kind: input, shape index: {}]
  %s9 = inlined_call_operand.hbm [shape: f32[2,40,256], index: 9, kind: output, shape index: {}]
  %s10 = sld [smem:[#allocation0]]
  $region85: #{tpu_custom_call.1} parent=0
    _
  %s12 = ssub.s32 1, %s10
  %s13 = scalar_select 0, %s12, %s10
  $region1: #{tpu_custom_call.1} parent=0
    #allocation2 [shape = 'u8[16384]{0}', space=vmem, size = 0x4000, scoped, tag = 'input window, operand 1']
    #allocation3 [shape = 's32[2]{0}', space=sflag, size = 0x8, scoped, tag = 'scoped memory for tpu_custom_call.1']
    #allocation4 [shape = 's32[2]{0}', space=sflag, size = 0x8, scoped, tag = 'scoped memory for tpu_custom_call.1']
    #allocation5 [shape = 'u8[16384]{0}', space=vmem, size = 0x4000, scoped, tag = 'input window, operand 2']
    #allocation6 [shape = 's32[2]{0}', space=sflag, size = 0x8, scoped, tag = 'scoped memory for tpu_custom_call.1']
    #allocation7 [shape = 'u8[2048]{0}', space=vmem, size = 0x800, scoped, tag = 'input window, operand 3, single buffered']
    #allocation8 [shape = 'u8[2048]{0}', space=vmem, size = 0x800, scoped, tag = 'input window, operand 5, single buffered']
    #allocation9 [shape = 's32[1]{0}', space=sflag, size = 0x4, scoped, tag = 'scoped memory for tpu_custom_call.1']
    #allocation10 [shape = 'u8[81920]{0}', space=vmem, size = 0x14000, scoped, tag = 'output window, operand 0']
    %14 = vsyncpa [#allocation3], 0
    %s15 = scalar_lea.sflag [#allocation3], 1
    %16 = vsyncpa %s15, 0
    %17 = vsyncpa [#allocation6], 0
    %s18 = scalar_lea.sflag [#allocation6], 1
    %19 = vsyncpa %s18, 0
    %20 = vsyncpa [#allocation9], 0
    %21 = vsyncpa [#allocation4], 0
    %s22 = scalar_lea.sflag [#allocation4], 1
    %23 = vsyncpa %s22, 0
    loop: start=0, step=1, limit=4
    $region2: #{tpu_custom_call.1} parent=1 // loop_pre_header
      _
    $region3: #{tpu_custom_call.1} parent=1 // loop_header
      %s25 = sphi 0, %s29
      %p26 = scmp.ge.s32.totalorder %s25, 4
      %s32 = sphi 0, %s44
      %s33 = sphi 0, %s40
      %s34 = sphi 0, %s32
      %s35 = sphi 0, %s33
      %s36 = sphi 0, %s34
      %s37 = sphi 0, %s35
      %s49 = sphi 0, %s51
      %s52 = sphi 0, %s49
      %s53 = sphi 0, %s52
      %s69 = sphi 0, %s53
      %s77 = sphi 0, %s79
      %s80 = sphi 0, %s77
      %s81 = sphi 0, %s80
      %s97 = sphi 0, %s81
      %s105 = sphi 0, %s107
      %s108 = sphi 0, %s105
      %s109 = sphi 0, %s108
      %s125 = sphi 0, %s109
      %s129 = sphi 0, %s129
      %s131 = sphi 0, %s129
      %s132 = sphi 0, %s131
      %s146 = sphi 0, %s132
      %s150 = sphi 0, %s150
      %s152 = sphi 0, %s150
      %s153 = sphi 0, %s152
      %s167 = sphi 0, %s153
      %s171 = sphi 0, %s171
      %s173 = sphi 0, %s171
      %s174 = sphi 0, %s173
      %s188 = sphi 0, %s174
      %s192 = sphi 0, %s192
      %s194 = sphi 0, %s192
      %s195 = sphi 0, %s194
      %s209 = sphi 0, %s195
      %s213 = sphi 0, %s213
      %s215 = sphi 0, %s213
      %s216 = sphi 0, %s215
      %s230 = sphi 0, %s216
      %s234 = sphi 0, %s234
      %s236 = sphi 0, %s234
      %s237 = sphi 0, %s236
      %s251 = sphi 0, %s237
      %s259 = sphi 0, %s261
      %s262 = sphi 0, %s259
      %s263 = sphi 0, %s262
      %s279 = sphi 0, %s263
    $region4: #{tpu_custom_call.1} parent=1 // loop_header_branch
      %28 = sbr.rel (%p26) target = $region8
    $region5: #{tpu_custom_call.1} parent=1 // loop_body
      %s30 = ssub.s32 %s25, 1
      %s31 = ssub.s32 %s25, 2
      %s38 = sadd.s32 1, %s33
      %p39 = scmp.ge.s32.totalorder %s38, 1
      %s40 = scalar_select %p39, 0, %s38
      %s41 = sadd.s32 1, %s32
      %s42 = scalar_select %p39, %s41, %s32
      %p43 = scmp.ge.s32.totalorder %s42, 2
      %s44 = scalar_select %p43, 0, %s42
      %s45 = ssub.s32 %s32, %s44
      %s46 = ssub.s32 %s33, %s40
      %s47 = sor.u32 %s45, %s46
      %p48 = scmp.eq.s32.totalorder %s47, 0
      %s50 = sadd.s32 %s49, 1
      %s51 = scalar_select %p48, %s49, %s50
      %p54 = pneg %p48
      %p55 = scmp.eq.s32.totalorder %s25, 1
      %p56 = por %p54, %p55
      %p57 = scmp.ne.s32.totalorder %s49, %s52
      %p58 = scmp.eq.s32.totalorder %s25, 0
      %p59 = por %p57, %p58
      %p60 = scmp.ne.s32.totalorder %s49, %s52
      %p61 = scmp.eq.s32.totalorder %s30, 1
      %p62 = por %p60, %p61
      %p63 = scmp.ne.s32.totalorder %s52, %s53
      %p64 = scmp.eq.s32.totalorder %s30, 0
      %p65 = por %p63, %p64
      %p66 = scmp.ne.s32.totalorder %s52, %s53
      %p67 = scmp.eq.s32.totalorder %s31, 1
      %p68 = por %p66, %p67
      %p70 = scmp.ne.s32.totalorder %s53, %s69
      %p71 = scmp.eq.s32.totalorder %s31, 0
      %p72 = por %p70, %p71
      %s73 = ssub.s32 %s32, %s44
      %s74 = ssub.s32 %s33, %s40
      %s75 = sor.u32 %s73, %s74
      %p76 = scmp.eq.s32.totalorder %s75, 0
      %s78 = sadd.s32 %s77, 1
      %s79 = scalar_select %p76, %s77, %s78
      %p82 = pneg %p76
      %p83 = scmp.eq.s32.totalorder %s25, 1
      %p84 = por %p82, %p83
      %p85 = scmp.ne.s32.totalorder %s77, %s80
      %p86 = scmp.eq.s32.totalorder %s25, 0
      %p87 = por %p85, %p86
      %p88 = scmp.ne.s32.totalorder %s77, %s80
      %p89 = scmp.eq.s32.totalorder %s30, 1
      %p90 = por %p88, %p89
      %p91 = scmp.ne.s32.totalorder %s80, %s81
      %p92 = scmp.eq.s32.totalorder %s30, 0
      %p93 = por %p91, %p92
      %p94 = scmp.ne.s32.totalorder %s80, %s81
      %p95 = scmp.eq.s32.totalorder %s31, 1
      %p96 = por %p94, %p95
      %p98 = scmp.ne.s32.totalorder %s81, %s97
      %p99 = scmp.eq.s32.totalorder %s31, 0
      %p100 = por %p98, %p99
      %s101 = ssub.s32 %s32, %s44
      %s102 = ssub.s32 %s33, %s40
      %s103 = sor.u32 %s101, %s102
      %p104 = scmp.eq.s32.totalorder %s103, 0
      %s106 = sadd.s32 %s105, 1
      %s107 = scalar_select %p104, %s105, %s106
      %p110 = pneg %p104
      %p111 = scmp.eq.s32.totalorder %s25, 1
      %p112 = por %p110, %p111
      %p113 = scmp.ne.s32.totalorder %s105, %s108
      %p114 = scmp.eq.s32.totalorder %s25, 0
      %p115 = por %p113, %p114
      %p116 = scmp.ne.s32.totalorder %s105, %s108
      %p117 = scmp.eq.s32.totalorder %s30, 1
      %p118 = por %p116, %p117
      %p119 = scmp.ne.s32.totalorder %s108, %s109
      %p120 = scmp.eq.s32.totalorder %s30, 0
      %p121 = por %p119, %p120
      %p122 = scmp.ne.s32.totalorder %s108, %s109
      %p123 = scmp.eq.s32.totalorder %s31, 1
      %p124 = por %p122, %p123
      %p126 = scmp.ne.s32.totalorder %s109, %s125
      %p127 = scmp.eq.s32.totalorder %s31, 0
      %p128 = por %p126, %p127
      %s130 = sadd.s32 %s129, 1
      %p133 = scmp.eq.s32.totalorder %s25, 1
      %p134 = scmp.ne.s32.totalorder %s129, %s131
      %p135 = scmp.eq.s32.totalorder %s25, 0
      %p136 = por %p134, %p135
      %p137 = scmp.ne.s32.totalorder %s129, %s131
      %p138 = scmp.eq.s32.totalorder %s30, 1
      %p139 = por %p137, %p138
      %p140 = scmp.ne.s32.totalorder %s131, %s132
      %p141 = scmp.eq.s32.totalorder %s30, 0
      %p142 = por %p140, %p141
      %p143 = scmp.ne.s32.totalorder %s131, %s132
      %p144 = scmp.eq.s32.totalorder %s31, 1
      %p145 = por %p143, %p144
      %p147 = scmp.ne.s32.totalorder %s132, %s146
      %p148 = scmp.eq.s32.totalorder %s31, 0
      %p149 = por %p147, %p148
      %s151 = sadd.s32 %s150, 1
      %p154 = scmp.eq.s32.totalorder %s25, 1
      %p155 = scmp.ne.s32.totalorder %s150, %s152
      %p156 = scmp.eq.s32.totalorder %s25, 0
      %p157 = por %p155, %p156
      %p158 = scmp.ne.s32.totalorder %s150, %s152
      %p159 = scmp.eq.s32.totalorder %s30, 1
      %p160 = por %p158, %p159
      %p161 = scmp.ne.s32.totalorder %s152, %s153
      %p162 = scmp.eq.s32.totalorder %s30, 0
      %p163 = por %p161, %p162
      %p164 = scmp.ne.s32.totalorder %s152, %s153
      %p165 = scmp.eq.s32.totalorder %s31, 1
      %p166 = por %p164, %p165
      %p168 = scmp.ne.s32.totalorder %s153, %s167
      %p169 = scmp.eq.s32.totalorder %s31, 0
      %p170 = por %p168, %p169
      %s172 = sadd.s32 %s171, 1
      %p175 = scmp.eq.s32.totalorder %s25, 1
      %p176 = scmp.ne.s32.totalorder %s171, %s173
      %p177 = scmp.eq.s32.totalorder %s25, 0
      %p178 = por %p176, %p177
      %p179 = scmp.ne.s32.totalorder %s171, %s173
      %p180 = scmp.eq.s32.totalorder %s30, 1
      %p181 = por %p179, %p180
      %p182 = scmp.ne.s32.totalorder %s173, %s174
      %p183 = scmp.eq.s32.totalorder %s30, 0
      %p184 = por %p182, %p183
      %p185 = scmp.ne.s32.totalorder %s173, %s174
      %p186 = scmp.eq.s32.totalorder %s31, 1
      %p187 = por %p185, %p186
      %p189 = scmp.ne.s32.totalorder %s174, %s188
      %p190 = scmp.eq.s32.totalorder %s31, 0
      %p191 = por %p189, %p190
      %s193 = sadd.s32 %s192, 1
      %p196 = scmp.eq.s32.totalorder %s25, 1
      %p197 = scmp.ne.s32.totalorder %s192, %s194
      %p198 = scmp.eq.s32.totalorder %s25, 0
      %p199 = por %p197, %p198
      %p200 = scmp.ne.s32.totalorder %s192, %s194
      %p201 = scmp.eq.s32.totalorder %s30, 1
      %p202 = por %p200, %p201
      %p203 = scmp.ne.s32.totalorder %s194, %s195
      %p204 = scmp.eq.s32.totalorder %s30, 0
      %p205 = por %p203, %p204
      %p206 = scmp.ne.s32.totalorder %s194, %s195
      %p207 = scmp.eq.s32.totalorder %s31, 1
      %p208 = por %p206, %p207
      %p210 = scmp.ne.s32.totalorder %s195, %s209
      %p211 = scmp.eq.s32.totalorder %s31, 0
      %p212 = por %p210, %p211
      %s214 = sadd.s32 %s213, 1
      %p217 = scmp.eq.s32.totalorder %s25, 1
      %p218 = scmp.ne.s32.totalorder %s213, %s215
      %p219 = scmp.eq.s32.totalorder %s25, 0
      %p220 = por %p218, %p219
      %p221 = scmp.ne.s32.totalorder %s213, %s215
      %p222 = scmp.eq.s32.totalorder %s30, 1
      %p223 = por %p221, %p222
      %p224 = scmp.ne.s32.totalorder %s215, %s216
      %p225 = scmp.eq.s32.totalorder %s30, 0
      %p226 = por %p224, %p225
      %p227 = scmp.ne.s32.totalorder %s215, %s216
      %p228 = scmp.eq.s32.totalorder %s31, 1
      %p229 = por %p227, %p228
      %p231 = scmp.ne.s32.totalorder %s216, %s230
      %p232 = scmp.eq.s32.totalorder %s31, 0
      %p233 = por %p231, %p232
      %s235 = sadd.s32 %s234, 1
      %p238 = scmp.eq.s32.totalorder %s25, 1
      %p239 = scmp.ne.s32.totalorder %s234, %s236
      %p240 = scmp.eq.s32.totalorder %s25, 0
      %p241 = por %p239, %p240
      %p242 = scmp.ne.s32.totalorder %s234, %s236
      %p243 = scmp.eq.s32.totalorder %s30, 1
      %p244 = por %p242, %p243
      %p245 = scmp.ne.s32.totalorder %s236, %s237
      %p246 = scmp.eq.s32.totalorder %s30, 0
      %p247 = por %p245, %p246
      %p248 = scmp.ne.s32.totalorder %s236, %s237
      %p249 = scmp.eq.s32.totalorder %s31, 1
      %p250 = por %p248, %p249
      %p252 = scmp.ne.s32.totalorder %s237, %s251
      %p253 = scmp.eq.s32.totalorder %s31, 0
      %p254 = por %p252, %p253
      %s255 = ssub.s32 %s32, %s44
      %s256 = ssub.s32 %s33, %s40
      %s257 = sor.u32 %s255, %s256
      %p258 = scmp.eq.s32.totalorder %s257, 0
      %s260 = sadd.s32 %s259, 1
      %s261 = scalar_select %p258, %s259, %s260
      %p264 = pneg %p258
      %p265 = scmp.eq.s32.totalorder %s25, 1
      %p266 = por %p264, %p265
      %p267 = scmp.ne.s32.totalorder %s259, %s262
      %p268 = scmp.eq.s32.totalorder %s25, 0
      %p269 = por %p267, %p268
      %p270 = scmp.ne.s32.totalorder %s259, %s262
      %p271 = scmp.eq.s32.totalorder %s30, 1
      %p272 = por %p270, %p271
      %p273 = scmp.ne.s32.totalorder %s262, %s263
      %p274 = scmp.eq.s32.totalorder %s30, 0
      %p275 = por %p273, %p274
      %p276 = scmp.ne.s32.totalorder %s262, %s263
      %p277 = scmp.eq.s32.totalorder %s31, 1
      %p278 = por %p276, %p277
      %p280 = scmp.ne.s32.totalorder %s263, %s279
      %p281 = scmp.eq.s32.totalorder %s31, 0
      %p282 = por %p280, %p281
      %p283 = scmp.le.s32.totalorder 1, %s25
      %p284 = scmp.lt.s32.totalorder %s25, 3
      %p285 = pnand %p283, %p284
      %p286 = pneg %p285
      // Predicated region
      $region9: #{tpu_custom_call.1} parent=5 // pred_check
        _
      $region10: #{tpu_custom_call.1} parent=5 // pred_check_branch
        %288 = sbr.rel (%p285) target = $region12
      $region11: #{tpu_custom_call.1} parent=5 // pred_region
        %s289 = ssub.s32 %s25, 1
        // Predicated region
        $region13: #{tpu_custom_call.1} parent=11 // pred_check
          %p290 = pneg %p142
        $region14: #{tpu_custom_call.1} parent=11 // pred_check_branch
          %292 = sbr.rel (%p290) target = $region16
        $region15: #{tpu_custom_call.1} parent=11 // pred_region
          %s294 = ssub.s32 64, 64
          %295 = vsyncadd [#allocation6], %s294
          %s297 = sshll.u32 [#allocation7], 4
          %s298 = int_to_ptr.vmem [resolvable:$true] %s297
          %300 = dma.hbm_to_vmem [thread:$0]  %s3, 64, %s298, [#allocation6]
        $region16: #{tpu_custom_call.1} parent=11 // pred_fallthru
          _
        // Predicated region
        $region17: #{tpu_custom_call.1} parent=11 // pred_check
          %p301 = pneg %p163
        $region18: #{tpu_custom_call.1} parent=11 // pred_check_branch
          %303 = sbr.rel (%p301) target = $region20
        $region19: #{tpu_custom_call.1} parent=11 // pred_region
          _
        $region20: #{tpu_custom_call.1} parent=11 // pred_fallthru
          _
        // Predicated region
        $region21: #{tpu_custom_call.1} parent=11 // pred_check
          %p304 = pneg %p184
        $region22: #{tpu_custom_call.1} parent=11 // pred_check_branch
          %306 = sbr.rel (%p304) target = $region24
        $region23: #{tpu_custom_call.1} parent=11 // pred_region
          %s308 = ssub.s32 64, 64
          %309 = vsyncadd [#allocation9], %s308
          %s311 = sshll.u32 [#allocation8], 4
          %s312 = int_to_ptr.vmem [resolvable:$true] %s311
          %314 = dma.hbm_to_vmem [thread:$0]  %s5, 64, %s312, [#allocation9]
        $region24: #{tpu_custom_call.1} parent=11 // pred_fallthru
          _
        // Predicated region
        $region25: #{tpu_custom_call.1} parent=11 // pred_check
          %p315 = pneg %p205
        $region26: #{tpu_custom_call.1} parent=11 // pred_check_branch
          %317 = sbr.rel (%p315) target = $region28
        $region27: #{tpu_custom_call.1} parent=11 // pred_region
          _
        $region28: #{tpu_custom_call.1} parent=11 // pred_fallthru
          _
        // Predicated region
        $region29: #{tpu_custom_call.1} parent=11 // pred_check
          %p318 = pneg %p226
        $region30: #{tpu_custom_call.1} parent=11 // pred_check_branch
          %320 = sbr.rel (%p318) target = $region32
        $region31: #{tpu_custom_call.1} parent=11 // pred_region
          _
        $region32: #{tpu_custom_call.1} parent=11 // pred_fallthru
          _
        // Predicated region
        $region33: #{tpu_custom_call.1} parent=11 // pred_check
          %p321 = pneg %p247
        $region34: #{tpu_custom_call.1} parent=11 // pred_check_branch
          %323 = sbr.rel (%p321) target = $region36
        $region35: #{tpu_custom_call.1} parent=11 // pred_region
          _
        $region36: #{tpu_custom_call.1} parent=11 // pred_fallthru
          _
      $region12: #{tpu_custom_call.1} parent=5 // pred_fallthru
        _
      %p324 = scmp.lt.s32.totalorder %s25, 2
      // Predicated region
      $region37: #{tpu_custom_call.1} parent=5 // pred_check
        %p325 = pneg %p324
      $region38: #{tpu_custom_call.1} parent=5 // pred_check_branch
        %327 = sbr.rel (%p325) target = $region40
      $region39: #{tpu_custom_call.1} parent=5 // pred_region
        // Predicated region
        $region41: #{tpu_custom_call.1} parent=39 // pred_check
          %p328 = pneg %p59
        $region42: #{tpu_custom_call.1} parent=39 // pred_check_branch
          %330 = sbr.rel (%p328) target = $region44
        $region43: #{tpu_custom_call.1} parent=39 // pred_region
          %s331 = smul.u32 2, %s33
          %p332 = scmp.lt.s32.totalorder %s32, 1
          %s333 = scalar_select %p332, %s32, 1
          %p334 = scmp.lt.s32.totalorder %s331, 1
          %s335 = scalar_select %p334, %s331, 1
          %s336 = smul.addr %s333, 2
          %s337 = sadd.s32 %s335, %s336
          %s338 = smul.addr %s337, 8
          %s339 = scalar_lea.vmem %s0, %s338
          %s340 = smul.u32 2, %s33
        $region44: #{tpu_custom_call.1} parent=39 // pred_fallthru
          _
        // Predicated region
        $region45: #{tpu_custom_call.1} parent=39 // pred_check
          %p341 = pneg %p87
        $region46: #{tpu_custom_call.1} parent=39 // pred_check_branch
          %343 = sbr.rel (%p341) target = $region48
        $region47: #{tpu_custom_call.1} parent=39 // pred_region
          %s344 = sand.u32 %s77, 1
          %s345 = scalar_lea.sflag [#allocation3], %s344
          %s346 = sand.u32 %s77, 1
          %s347 = smul.addr %s346, 16
          %s348 = scalar_lea.vmem [#allocation2], %s347
          %s349 = smul.u32 2, %s33
          %s351 = ssub.s32 256, 256
          %352 = vsyncadd %s345, %s351
          %s353 = smul.addr %s32, 2
          %s354 = sadd.s32 %s349, %s353
          %s355 = smul.addr %s354, 128
          %s356 = scalar_lea.hbm %s1, %s355
          %s358 = sshll.u32 %s348, 4
          %s359 = int_to_ptr.vmem [resolvable:$true] %s358
          %361 = dma.hbm_to_vmem [thread:$0]  %s356, 256, %s359, %s345
        $region48: #{tpu_custom_call.1} parent=39 // pred_fallthru
          _
        // Predicated region
        $region49: #{tpu_custom_call.1} parent=39 // pred_check
          %p362 = pneg %p115
        $region50: #{tpu_custom_call.1} parent=39 // pred_check_branch
          %364 = sbr.rel (%p362) target = $region52
        $region51: #{tpu_custom_call.1} parent=39 // pred_region
          %s365 = sand.u32 %s25, 1
          %s366 = scalar_lea.sflag [#allocation6], %s365
          %s367 = sand.u32 %s105, 1
          %s368 = smul.addr %s367, 16
          %s369 = scalar_lea.vmem [#allocation5], %s368
          %s370 = smul.u32 2, %s33
          %s372 = ssub.s32 256, 256
          %373 = vsyncadd %s366, %s372
          %s374 = smul.addr %s32, 2
          %s375 = sadd.s32 %s370, %s374
          %s376 = smul.addr %s375, 128
          %s377 = scalar_lea.hbm %s2, %s376
          %s379 = sshll.u32 %s369, 4
          %s380 = int_to_ptr.vmem [resolvable:$true] %s379
          %382 = dma.hbm_to_vmem [thread:$0]  %s377, 256, %s380, %s366
        $region52: #{tpu_custom_call.1} parent=39 // pred_fallthru
          _
      $region40: #{tpu_custom_call.1} parent=5 // pred_fallthru
        _
      %p383 = scmp.le.s32.totalorder 1, %s25
      %p384 = scmp.lt.s32.totalorder %s25, 3
      %p385 = pnand %p383, %p384
      %p386 = pneg %p385
      // Predicated region
      $region53: #{tpu_custom_call.1} parent=5 // pred_check
        _
      $region54: #{tpu_custom_call.1} parent=5 // pred_check_branch
        %388 = sbr.rel (%p385) target = $region56
      $region55: #{tpu_custom_call.1} parent=5 // pred_region
        %s389 = ssub.s32 %s25, 1
        %s390 = sand.u32 %s80, 1
        %s391 = scalar_lea.sflag [#allocation3], %s390
        %s392 = sand.u32 %s80, 1
        %s393 = smul.addr %s392, 16
        %s394 = scalar_lea.vmem [#allocation2], %s393
        // Predicated region
        $region57: #{tpu_custom_call.1} parent=55 // pred_check
          %p395 = pneg %p93
        $region58: #{tpu_custom_call.1} parent=55 // pred_check_branch
          %397 = sbr.rel (%p395) target = $region60
        $region59: #{tpu_custom_call.1} parent=55 // pred_region
          %398 = dma.done %s391, 256
        $region60: #{tpu_custom_call.1} parent=55 // pred_fallthru
          _
        %s399 = sand.u32 %s30, 1
        %s400 = scalar_lea.sflag [#allocation6], %s399
        %s401 = sand.u32 %s108, 1
        %s402 = smul.addr %s401, 16
        %s403 = scalar_lea.vmem [#allocation5], %s402
        // Predicated region
        $region61: #{tpu_custom_call.1} parent=55 // pred_check
          %p404 = pneg %p121
        $region62: #{tpu_custom_call.1} parent=55 // pred_check_branch
          %406 = sbr.rel (%p404) target = $region64
        $region63: #{tpu_custom_call.1} parent=55 // pred_region
          %407 = dma.done %s400, 256
        $region64: #{tpu_custom_call.1} parent=55 // pred_fallthru
          _
        // Predicated region
        $region65: #{tpu_custom_call.1} parent=55 // pred_check
          %p408 = pneg %p142
        $region66: #{tpu_custom_call.1} parent=55 // pred_check_branch
          %410 = sbr.rel (%p408) target = $region68
        $region67: #{tpu_custom_call.1} parent=55 // pred_region
          %411 = dma.done [#allocation6], 64
        $region68: #{tpu_custom_call.1} parent=55 // pred_fallthru
          _
        // Predicated region
        $region69: #{tpu_custom_call.1} parent=55 // pred_check
          %p412 = pneg %p184
        $region70: #{tpu_custom_call.1} parent=55 // pred_check_branch
          %414 = sbr.rel (%p412) target = $region72
        $region71: #{tpu_custom_call.1} parent=55 // pred_region
          %415 = dma.done [#allocation9], 64
        $region72: #{tpu_custom_call.1} parent=55 // pred_fallthru
          _
        %s416 = smul.u32 2, %s35
        %p417 = scmp.lt.s32.totalorder %s34, 1
        %s418 = scalar_select %p417, %s34, 1
        %p419 = scmp.lt.s32.totalorder %s416, 1
        %s420 = scalar_select %p419, %s416, 1
        %s421 = smul.addr %s418, 2
        %s422 = sadd.s32 %s420, %s421
        %s423 = smul.addr %s422, 8
        %s424 = scalar_lea.vmem %s0, %s423
        %p425 = pneg %p65
        %p426 = pneg %p62
        %s427 = sand.u32 %s80, 1
        %s428 = scalar_lea.sflag [#allocation3], %s427
        %s429 = sand.u32 %s80, 1
        %s430 = smul.addr %s429, 16
        %s431 = scalar_lea.vmem [#allocation2], %s430
        %p432 = pneg %p93
        %p433 = pneg %p90
        %s434 = sand.u32 %s30, 1
        %s435 = scalar_lea.sflag [#allocation6], %s434
        %s436 = sand.u32 %s108, 1
        %s437 = smul.addr %s436, 16
        %s438 = scalar_lea.vmem [#allocation5], %s437
        %p439 = pneg %p121
        %p440 = pneg %p118
        %p441 = pneg %p142
        %p442 = pneg %p139
        %p443 = pneg %p163
        %p444 = pneg %p160
        %p445 = pneg %p184
        %p446 = pneg %p181
        %p447 = pneg %p205
        %p448 = pneg %p202
        %p449 = pneg %p226
        %p450 = pneg %p223
        %p451 = pneg %p247
        %p452 = pneg %p244
        %p453 = pneg %p275
        %p454 = pneg %p272
        %s455 = sand.u32 %s262, 1
        %s456 = scalar_lea.sflag [#allocation4], %s455
        %s457 = sand.u32 %s262, 1
        %s458 = smul.addr %s457, 80
        %s459 = scalar_lea.vmem [#allocation10], %s458
        %s460 = smul.u32 2, %s35
        %p461 = scmp.lt.s32.totalorder %s34, 1
        %s462 = scalar_select %p461, %s34, 1
        %p463 = scmp.lt.s32.totalorder %s460, 1
        %s464 = scalar_select %p463, %s460, 1
        %s465 = smul.addr %s462, 2
        %s466 = sadd.s32 %s464, %s465
        %s467 = smul.addr %s466, 8
        %s468 = scalar_lea.vmem %s0, %s467
        %s469 = smul.u32 2, %s35
        %s470 = smul.u32 2, %s35
        %s471 = smul.u32 2, %s35
        %s472 = smul.u32 2, %s35
        %v474 = vld [vmem:[%s468] sm:$0xff]
        %v475 = vld [vmem:[%s468 + $0x8] sm:$0xff]
        %v476 = vmax.f32 %v474, -1.0
        %v477 = vmax.f32 %v475, -1.0
        %v478 = vmin.f32 %v476, 1.0
        %v479 = vmin.f32 %v477, 1.0
        %v480 = vpack.c.bf16 %v478, %v478
        %v481 = vpack.c.bf16 %v479, %v479
        %v482 = vld [vmem:[%s394] sm:$0xff]
        %v483 = vld [vmem:[%s394 + $0x8] sm:$0xff]
        %v484 = vmax.f32 %v482, -1.0
        %v485 = vmax.f32 %v483, -1.0
        %v486 = vmin.f32 %v484, 1.0
        %v487 = vmin.f32 %v485, 1.0
        %v488 = vpack.c.bf16 %v486, %v486
        %v489 = vpack.c.bf16 %v487, %v487
        %v490 = vld [vmem:[#allocation7] sm:$0xf]
        %v491 = vld [vmem:[%s4] sm:$0xff]
        %493 = vset.pattern.permute.xlu0 0
        %494 = vperm.xlu0 %493, %v491
        %v495 = vpop.permute.xlu0 %494
        %vm497 = vcmask 64512
        %v499 = vsel %vm497, %v490, 0
        %vm501 = vcmask 1043456
        %v503 = vsel %vm501, %v480, 0
        %v506 = vsel %vm501, %v481, 0
        %508 = vmatprep.subr.bf16.mxu0 0
        %509 = vmatpush1.bf16.msra.mxu0 0
        %510 = vmatprep.subr.bf16.mxu0 0
        %511 = vmatpush1.bf16.msra.mxu0 0
        %512 = vmatprep.subr.bf16.mxu0 0
        %513 = vmatpush1.bf16.msra.mxu0 0
        %514 = vmatprep.subr.bf16.mxu0 0
        %515 = vmatpush1.bf16.msra.mxu0 0
        %516 = vmatprep.subr.bf16.mxu0 0
        %517 = vmatpush1.bf16.msra.mxu0 0
        %518 = vmatprep.subr.bf16.mxu0 0
        %519 = vmatpush1.bf16.msra.mxu0 0
        %520 = vmatprep.subr.bf16.mxu0 0
        %521 = vmatpush1.bf16.msra.mxu0 0
        %522 = vmatprep.subr.bf16.mxu0 %v506
        %523 = vmatpush1.bf16.msra.mxu0 %v503
        %524 = vmatprep.subr.bf16.mxu0 0
        %525 = vmatpush2.bf16.msra.mxu0 0
        %526 = vmatprep.subr.bf16.mxu0 0
        %527 = vmatpush2.bf16.msra.mxu0 0
        %528 = vmatprep.subr.bf16.mxu0 0
        %529 = vmatpush2.bf16.msra.mxu0 0
        %530 = vmatprep.subr.bf16.mxu0 0
        %531 = vmatpush2.bf16.msra.mxu0 0
        %532 = vmatprep.subr.bf16.mxu0 0
        %533 = vmatpush2.bf16.msra.mxu0 0
        %534 = vmatprep.subr.bf16.mxu0 0
        %535 = vmatpush2.bf16.msra.mxu0 0
        %536 = vmatprep.subr.bf16.mxu0 0
        %537 = vmatpush2.bf16.msra.mxu0 0
        %538 = vmatprep.subr.bf16.mxu0 0
        %539 = vmatpush2.bf16.msra.mxu0 0
        %540 = vmatprep.mubr.bf16.mxu0 0
        %541 = vmatmul.mubr.bf16.gmra.mxu0 %v499
        %v542 = vpop.f32.mrf.mxu0
        %v543 = vadd.f32 %v495, %v542
        %v544 = vpop.f32.mrf.mxu0
        %v545 = vadd.f32 %v495, %v544
        %v546 = vpop.f32.mrf.mxu0
        %v547 = vpop.f32.mrf.mxu0
        %548 = vdwg.mxu0
        %v549 = vld [vmem:[#allocation8] sm:$0xf]
        %v550 = vld [vmem:[%s6] sm:$0xff]
        %552 = vset.pattern.permute.xlu0 0
        %553 = vperm.xlu0 %552, %v550
        %v554 = vpop.permute.xlu0 %553
        %v557 = vsel %vm497, %v549, 0
        %v560 = vsel %vm501, %v488, 0
        %v563 = vsel %vm501, %v489, 0
        %565 = vmatprep.subr.bf16.mxu0 0
        %566 = vmatpush1.bf16.msra.mxu0 0
        %567 = vmatprep.subr.bf16.mxu0 0
        %568 = vmatpush1.bf16.msra.mxu0 0
        %569 = vmatprep.subr.bf16.mxu0 0
        %570 = vmatpush1.bf16.msra.mxu0 0
        %571 = vmatprep.subr.bf16.mxu0 0
        %572 = vmatpush1.bf16.msra.mxu0 0
        %573 = vmatprep.subr.bf16.mxu0 0
        %574 = vmatpush1.bf16.msra.mxu0 0
        %575 = vmatprep.subr.bf16.mxu0 0
        %576 = vmatpush1.bf16.msra.mxu0 0
        %577 = vmatprep.subr.bf16.mxu0 0
        %578 = vmatpush1.bf16.msra.mxu0 0
        %579 = vmatprep.subr.bf16.mxu0 %v563
        %580 = vmatpush1.bf16.msra.mxu0 %v560
        %581 = vmatprep.subr.bf16.mxu0 0
        %582 = vmatpush2.bf16.msra.mxu0 0
        %583 = vmatprep.subr.bf16.mxu0 0
        %584 = vmatpush2.bf16.msra.mxu0 0
        %585 = vmatprep.subr.bf16.mxu0 0
        %586 = vmatpush2.bf16.msra.mxu0 0
        %587 = vmatprep.subr.bf16.mxu0 0
        %588 = vmatpush2.bf16.msra.mxu0 0
        %589 = vmatprep.subr.bf16.mxu0 0
        %590 = vmatpush2.bf16.msra.mxu0 0
        %591 = vmatprep.subr.bf16.mxu0 0
        %592 = vmatpush2.bf16.msra.mxu0 0
        %593 = vmatprep.subr.bf16.mxu0 0
        %594 = vmatpush2.bf16.msra.mxu0 0
        %595 = vmatprep.subr.bf16.mxu0 0
        %596 = vmatpush2.bf16.msra.mxu0 0
        %597 = vmatprep.mubr.bf16.mxu0 0
        %598 = vmatmul.mubr.bf16.gmra.mxu0 %v557
        %v599 = vpop.f32.mrf.mxu0
        %v600 = vadd.f32 %v554, %v599
        %v601 = vpop.f32.mrf.mxu0
        %v602 = vadd.f32 %v554, %v601
        %v603 = vpop.f32.mrf.mxu0
        %v604 = vpop.f32.mrf.mxu0
        %605 = vdwg.mxu0
        %v606 = vmax.f32 %v543, -1.0
        %v607 = vmax.f32 %v545, -1.0
        %v608 = vmin.f32 %v606, 1.0
        %v609 = vmin.f32 %v607, 1.0
        %v610 = vpack.c.bf16 %v608, %v608
        %v611 = vpack.c.bf16 %v609, %v609
        %v612 = vmax.f32 %v600, -1.0
        %v613 = vmax.f32 %v602, -1.0
        %v614 = vmin.f32 %v612, 1.0
        %v615 = vmin.f32 %v613, 1.0
        %v616 = vpack.c.bf16 %v614, %v614
        %v617 = vpack.c.bf16 %v615, %v615
        %v618 = vld [vmem:[%s7] sm:$0xf]
        %s619 = scalar_lea.vmem %s7, 4
        %v620 = vld [vmem:[%s619] sm:$0xf]
        %v622 = vsel %vm497, %v620, 0
        %v625 = vsel %vm501, %v616, 0
        %v628 = vsel %vm501, %v617, 0
        %630 = vmatprep.subr.bf16.mxu0 0
        %631 = vmatpush1.bf16.msra.mxu0 0
        %632 = vmatprep.subr.bf16.mxu0 0
        %633 = vmatpush1.bf16.msra.mxu0 0
        %634 = vmatprep.subr.bf16.mxu0 0
        %635 = vmatpush1.bf16.msra.mxu0 0
        %636 = vmatprep.subr.bf16.mxu0 0
        %637 = vmatpush1.bf16.msra.mxu0 0
        %638 = vmatprep.subr.bf16.mxu0 0
        %639 = vmatpush1.bf16.msra.mxu0 0
        %640 = vmatprep.subr.bf16.mxu0 0
        %641 = vmatpush1.bf16.msra.mxu0 0
        %642 = vmatprep.subr.bf16.mxu0 0
        %643 = vmatpush1.bf16.msra.mxu0 0
        %644 = vmatprep.subr.bf16.mxu0 %v628
        %645 = vmatpush1.bf16.msra.mxu0 %v625
        %646 = vmatprep.subr.bf16.mxu0 0
        %647 = vmatpush2.bf16.msra.mxu0 0
        %648 = vmatprep.subr.bf16.mxu0 0
        %649 = vmatpush2.bf16.msra.mxu0 0
        %650 = vmatprep.subr.bf16.mxu0 0
        %651 = vmatpush2.bf16.msra.mxu0 0
        %652 = vmatprep.subr.bf16.mxu0 0
        %653 = vmatpush2.bf16.msra.mxu0 0
        %654 = vmatprep.subr.bf16.mxu0 0
        %655 = vmatpush2.bf16.msra.mxu0 0
        %656 = vmatprep.subr.bf16.mxu0 0
        %657 = vmatpush2.bf16.msra.mxu0 0
        %658 = vmatprep.subr.bf16.mxu0 0
        %659 = vmatpush2.bf16.msra.mxu0 0
        %660 = vmatprep.subr.bf16.mxu0 0
        %661 = vmatpush2.bf16.msra.mxu0 0
        %662 = vmatprep.mubr.bf16.mxu0 0
        %663 = vmatmul.mubr.bf16.gmra.mxu0 %v622
        %v664 = vpop.f32.mrf.mxu0
        %v665 = vadd.f32 0.0, %v664
        %v666 = vpop.f32.mrf.mxu0
        %v667 = vadd.f32 0.0, %v666
        %v668 = vpop.f32.mrf.mxu0
        %v669 = vpop.f32.mrf.mxu0
        %670 = vdwg.mxu0
        %v672 = vsel %vm497, %v618, 0
        %v675 = vsel %vm501, %v610, 0
        %v678 = vsel %vm501, %v611, 0
        %680 = vmatprep.subr.bf16.mxu0 0
        %681 = vmatpush1.bf16.msra.mxu0 0
        %682 = vmatprep.subr.bf16.mxu0 0
        %683 = vmatpush1.bf16.msra.mxu0 0
        %684 = vmatprep.subr.bf16.mxu0 0
        %685 = vmatpush1.bf16.msra.mxu0 0
        %686 = vmatprep.subr.bf16.mxu0 0
        %687 = vmatpush1.bf16.msra.mxu0 0
        %688 = vmatprep.subr.bf16.mxu0 0
        %689 = vmatpush1.bf16.msra.mxu0 0
        %690 = vmatprep.subr.bf16.mxu0 0
        %691 = vmatpush1.bf16.msra.mxu0 0
        %692 = vmatprep.subr.bf16.mxu0 0
        %693 = vmatpush1.bf16.msra.mxu0 0
        %694 = vmatprep.subr.bf16.mxu0 %v678
        %695 = vmatpush1.bf16.msra.mxu0 %v675
        %696 = vmatprep.subr.bf16.mxu0 0
        %697 = vmatpush2.bf16.msra.mxu0 0
        %698 = vmatprep.subr.bf16.mxu0 0
        %699 = vmatpush2.bf16.msra.mxu0 0
        %700 = vmatprep.subr.bf16.mxu0 0
        %701 = vmatpush2.bf16.msra.mxu0 0
        %702 = vmatprep.subr.bf16.mxu0 0
        %703 = vmatpush2.bf16.msra.mxu0 0
        %704 = vmatprep.subr.bf16.mxu0 0
        %705 = vmatpush2.bf16.msra.mxu0 0
        %706 = vmatprep.subr.bf16.mxu0 0
        %707 = vmatpush2.bf16.msra.mxu0 0
        %708 = vmatprep.subr.bf16.mxu0 0
        %709 = vmatpush2.bf16.msra.mxu0 0
        %710 = vmatprep.subr.bf16.mxu0 0
        %711 = vmatpush2.bf16.msra.mxu0 0
        %712 = vmatprep.mubr.bf16.mxu0 0
        %713 = vmatmul.mubr.bf16.gmra.mxu0 %v672
        %v714 = vpop.f32.mrf.mxu0
        %v715 = vadd.f32 %v665, %v714
        %v716 = vpop.f32.mrf.mxu0
        %v717 = vadd.f32 %v667, %v716
        %v718 = vpop.f32.mrf.mxu0
        %v719 = vpop.f32.mrf.mxu0
        %720 = vdwg.mxu0
        %v721 = vld [vmem:[%s8] sm:$0xff]
        %723 = vset.pattern.permute.xlu0 0
        %724 = vperm.xlu0 %723, %v721
        %v725 = vpop.permute.xlu0 %724
        %v727 = vadd.f32 %v715, %v725
        %v728 = vadd.f32 %v717, %v725
        %729 = vst [vmem:[%s459] sm:$0xff] %v727
        %730 = vst [vmem:[%s459 + $0x8] sm:$0xff] %v728
        %v731 = vmax.f32 %v727, -1.0
        %v732 = vmax.f32 %v728, -1.0
        %v733 = vmin.f32 %v731, 1.0
        %v734 = vmin.f32 %v732, 1.0
        %v735 = vpack.c.bf16 %v733, %v733
        %v736 = vpack.c.bf16 %v734, %v734
        %s737 = scalar_lea.vmem %s7, 8
        %v738 = vld [vmem:[%s737] sm:$0xf]
        %s739 = scalar_lea.vmem %s7, 12
        %v740 = vld [vmem:[%s739] sm:$0xf]
        %v742 = vsel %vm497, %v740, 0
        %v745 = vsel %vm501, %v735, 0
        %v748 = vsel %vm501, %v736, 0
        %750 = vmatprep.subr.bf16.mxu0 0
        %751 = vmatpush1.bf16.msra.mxu0 0
        %752 = vmatprep.subr.bf16.mxu0 0
        %753 = vmatpush1.bf16.msra.mxu0 0
        %754 = vmatprep.subr.bf16.mxu0 0
        %755 = vmatpush1.bf16.msra.mxu0 0
        %756 = vmatprep.subr.bf16.mxu0 0
        %757 = vmatpush1.bf16.msra.mxu0 0
        %758 = vmatprep.subr.bf16.mxu0 0
        %759 = vmatpush1.bf16.msra.mxu0 0
        %760 = vmatprep.subr.bf16.mxu0 0
        %761 = vmatpush1.bf16.msra.mxu0 0
        %762 = vmatprep.subr.bf16.mxu0 0
        %763 = vmatpush1.bf16.msra.mxu0 0
        %764 = vmatprep.subr.bf16.mxu0 %v748
        %765 = vmatpush1.bf16.msra.mxu0 %v745
        %766 = vmatprep.subr.bf16.mxu0 0
        %767 = vmatpush2.bf16.msra.mxu0 0
        %768 = vmatprep.subr.bf16.mxu0 0
        %769 = vmatpush2.bf16.msra.mxu0 0
        %770 = vmatprep.subr.bf16.mxu0 0
        %771 = vmatpush2.bf16.msra.mxu0 0
        %772 = vmatprep.subr.bf16.mxu0 0
        %773 = vmatpush2.bf16.msra.mxu0 0
        %774 = vmatprep.subr.bf16.mxu0 0
        %775 = vmatpush2.bf16.msra.mxu0 0
        %776 = vmatprep.subr.bf16.mxu0 0
        %777 = vmatpush2.bf16.msra.mxu0 0
        %778 = vmatprep.subr.bf16.mxu0 0
        %779 = vmatpush2.bf16.msra.mxu0 0
        %780 = vmatprep.subr.bf16.mxu0 0
        %781 = vmatpush2.bf16.msra.mxu0 0
        %782 = vmatprep.mubr.bf16.mxu0 0
        %783 = vmatmul.mubr.bf16.gmra.mxu0 %v742
        %v784 = vpop.f32.mrf.mxu0
        %v785 = vadd.f32 0.0, %v784
        %v786 = vpop.f32.mrf.mxu0
        %v787 = vadd.f32 0.0, %v786
        %v788 = vpop.f32.mrf.mxu0
        %v789 = vpop.f32.mrf.mxu0
        %790 = vdwg.mxu0
        %v792 = vsel %vm497, %v738, 0
        %794 = vmatprep.subr.bf16.mxu0 0
        %795 = vmatpush1.bf16.msra.mxu0 0
        %796 = vmatprep.subr.bf16.mxu0 0
        %797 = vmatpush1.bf16.msra.mxu0 0
        %798 = vmatprep.subr.bf16.mxu0 0
        %799 = vmatpush1.bf16.msra.mxu0 0
        %800 = vmatprep.subr.bf16.mxu0 0
        %801 = vmatpush1.bf16.msra.mxu0 0
        %802 = vmatprep.subr.bf16.mxu0 0
        %803 = vmatpush1.bf16.msra.mxu0 0
        %804 = vmatprep.subr.bf16.mxu0 0
        %805 = vmatpush1.bf16.msra.mxu0 0
        %806 = vmatprep.subr.bf16.mxu0 0
        %807 = vmatpush1.bf16.msra.mxu0 0
        %808 = vmatprep.subr.bf16.mxu0 %v628
        %809 = vmatpush1.bf16.msra.mxu0 %v625
        %810 = vmatprep.subr.bf16.mxu0 0
        %811 = vmatpush2.bf16.msra.mxu0 0
        %812 = vmatprep.subr.bf16.mxu0 0
        %813 = vmatpush2.bf16.msra.mxu0 0
        %814 = vmatprep.subr.bf16.mxu0 0
        %815 = vmatpush2.bf16.msra.mxu0 0
        %816 = vmatprep.subr.bf16.mxu0 0
        %817 = vmatpush2.bf16.msra.mxu0 0
        %818 = vmatprep.subr.bf16.mxu0 0
        %819 = vmatpush2.bf16.msra.mxu0 0
        %820 = vmatprep.subr.bf16.mxu0 0
        %821 = vmatpush2.bf16.msra.mxu0 0
        %822 = vmatprep.subr.bf16.mxu0 0
        %823 = vmatpush2.bf16.msra.mxu0 0
        %824 = vmatprep.subr.bf16.mxu0 0
        %825 = vmatpush2.bf16.msra.mxu0 0
        %826 = vmatprep.mubr.bf16.mxu0 0
        %827 = vmatmul.mubr.bf16.gmra.mxu0 %v792
        %v828 = vpop.f32.mrf.mxu0
        %v829 = vadd.f32 %v785, %v828
        %v830 = vpop.f32.mrf.mxu0
        %v831 = vadd.f32 %v787, %v830
        %v832 = vpop.f32.mrf.mxu0
        %v833 = vpop.f32.mrf.mxu0
        %834 = vdwg.mxu0
        %s835 = scalar_lea.vmem %s8, 8
        %v836 = vld [vmem:[%s835] sm:$0xff]
        %838 = vset.pattern.permute.xlu0 0
        %839 = vperm.xlu0 %838, %v836
        %v840 = vpop.permute.xlu0 %839
        %v842 = vadd.f32 %v829, %v840
        %v843 = vadd.f32 %v831, %v840
        %844 = vst [vmem:[%s459 + $0x10] sm:$0xff] %v842
        %845 = vst [vmem:[%s459 + $0x18] sm:$0xff] %v843
        %v846 = vmax.f32 %v842, -1.0
        %v847 = vmax.f32 %v843, -1.0
        %v848 = vmin.f32 %v846, 1.0
        %v849 = vmin.f32 %v847, 1.0
        %v850 = vpack.c.bf16 %v848, %v848
        %v851 = vpack.c.bf16 %v849, %v849
        %s852 = scalar_lea.vmem %s7, 16
        %v853 = vld [vmem:[%s852] sm:$0xf]
        %s854 = scalar_lea.vmem %s7, 20
        %v855 = vld [vmem:[%s854] sm:$0xf]
        %v857 = vsel %vm497, %v855, 0
        %v860 = vsel %vm501, %v850, 0
        %v863 = vsel %vm501, %v851, 0
        %865 = vmatprep.subr.bf16.mxu0 0
        %866 = vmatpush1.bf16.msra.mxu0 0
        %867 = vmatprep.subr.bf16.mxu0 0
        %868 = vmatpush1.bf16.msra.mxu0 0
        %869 = vmatprep.subr.bf16.mxu0 0
        %870 = vmatpush1.bf16.msra.mxu0 0
        %871 = vmatprep.subr.bf16.mxu0 0
        %872 = vmatpush1.bf16.msra.mxu0 0
        %873 = vmatprep.subr.bf16.mxu0 0
        %874 = vmatpush1.bf16.msra.mxu0 0
        %875 = vmatprep.subr.bf16.mxu0 0
        %876 = vmatpush1.bf16.msra.mxu0 0
        %877 = vmatprep.subr.bf16.mxu0 0
        %878 = vmatpush1.bf16.msra.mxu0 0
        %879 = vmatprep.subr.bf16.mxu0 %v863
        %880 = vmatpush1.bf16.msra.mxu0 %v860
        %881 = vmatprep.subr.bf16.mxu0 0
        %882 = vmatpush2.bf16.msra.mxu0 0
        %883 = vmatprep.subr.bf16.mxu0 0
        %884 = vmatpush2.bf16.msra.mxu0 0
        %885 = vmatprep.subr.bf16.mxu0 0
        %886 = vmatpush2.bf16.msra.mxu0 0
        %887 = vmatprep.subr.bf16.mxu0 0
        %888 = vmatpush2.bf16.msra.mxu0 0
        %889 = vmatprep.subr.bf16.mxu0 0
        %890 = vmatpush2.bf16.msra.mxu0 0
        %891 = vmatprep.subr.bf16.mxu0 0
        %892 = vmatpush2.bf16.msra.mxu0 0
        %893 = vmatprep.subr.bf16.mxu0 0
        %894 = vmatpush2.bf16.msra.mxu0 0
        %895 = vmatprep.subr.bf16.mxu0 0
        %896 = vmatpush2.bf16.msra.mxu0 0
        %897 = vmatprep.mubr.bf16.mxu0 0
        %898 = vmatmul.mubr.bf16.gmra.mxu0 %v857
        %v899 = vpop.f32.mrf.mxu0
        %v900 = vadd.f32 0.0, %v899
        %v901 = vpop.f32.mrf.mxu0
        %v902 = vadd.f32 0.0, %v901
        %v903 = vpop.f32.mrf.mxu0
        %v904 = vpop.f32.mrf.mxu0
        %905 = vdwg.mxu0
        %v907 = vsel %vm497, %v853, 0
        %909 = vmatprep.subr.bf16.mxu0 0
        %910 = vmatpush1.bf16.msra.mxu0 0
        %911 = vmatprep.subr.bf16.mxu0 0
        %912 = vmatpush1.bf16.msra.mxu0 0
        %913 = vmatprep.subr.bf16.mxu0 0
        %914 = vmatpush1.bf16.msra.mxu0 0
        %915 = vmatprep.subr.bf16.mxu0 0
        %916 = vmatpush1.bf16.msra.mxu0 0
        %917 = vmatprep.subr.bf16.mxu0 0
        %918 = vmatpush1.bf16.msra.mxu0 0
        %919 = vmatprep.subr.bf16.mxu0 0
        %920 = vmatpush1.bf16.msra.mxu0 0
        %921 = vmatprep.subr.bf16.mxu0 0
        %922 = vmatpush1.bf16.msra.mxu0 0
        %923 = vmatprep.subr.bf16.mxu0 %v748
        %924 = vmatpush1.bf16.msra.mxu0 %v745
        %925 = vmatprep.subr.bf16.mxu0 0
        %926 = vmatpush2.bf16.msra.mxu0 0
        %927 = vmatprep.subr.bf16.mxu0 0
        %928 = vmatpush2.bf16.msra.mxu0 0
        %929 = vmatprep.subr.bf16.mxu0 0
        %930 = vmatpush2.bf16.msra.mxu0 0
        %931 = vmatprep.subr.bf16.mxu0 0
        %932 = vmatpush2.bf16.msra.mxu0 0
        %933 = vmatprep.subr.bf16.mxu0 0
        %934 = vmatpush2.bf16.msra.mxu0 0
        %935 = vmatprep.subr.bf16.mxu0 0
        %936 = vmatpush2.bf16.msra.mxu0 0
        %937 = vmatprep.subr.bf16.mxu0 0
        %938 = vmatpush2.bf16.msra.mxu0 0
        %939 = vmatprep.subr.bf16.mxu0 0
        %940 = vmatpush2.bf16.msra.mxu0 0
        %941 = vmatprep.mubr.bf16.mxu0 0
        %942 = vmatmul.mubr.bf16.gmra.mxu0 %v907
        %v943 = vpop.f32.mrf.mxu0
        %v944 = vadd.f32 %v900, %v943
        %v945 = vpop.f32.mrf.mxu0
        %v946 = vadd.f32 %v902, %v945
        %v947 = vpop.f32.mrf.mxu0
        %v948 = vpop.f32.mrf.mxu0
        %949 = vdwg.mxu0
        %s950 = scalar_lea.vmem %s8, 16
        %v951 = vld [vmem:[%s950] sm:$0xff]
        %953 = vset.pattern.permute.xlu0 0
        %954 = vperm.xlu0 %953, %v951
        %v955 = vpop.permute.xlu0 %954
        %v957 = vadd.f32 %v944, %v955
        %v958 = vadd.f32 %v946, %v955
        %959 = vst [vmem:[%s459 + $0x20] sm:$0xff] %v957
        %960 = vst [vmem:[%s459 + $0x28] sm:$0xff] %v958
        %v961 = vmax.f32 %v957, -1.0
        %v962 = vmax.f32 %v958, -1.0
        %v963 = vmin.f32 %v961, 1.0
        %v964 = vmin.f32 %v962, 1.0
        %v965 = vpack.c.bf16 %v963, %v963
        %v966 = vpack.c.bf16 %v964, %v964
        %s967 = scalar_lea.vmem %s7, 24
        %v968 = vld [vmem:[%s967] sm:$0xf]
        %s969 = scalar_lea.vmem %s7, 28
        %v970 = vld [vmem:[%s969] sm:$0xf]
        %v972 = vsel %vm497, %v970, 0
        %v975 = vsel %vm501, %v965, 0
        %v978 = vsel %vm501, %v966, 0
        %980 = vmatprep.subr.bf16.mxu0 0
        %981 = vmatpush1.bf16.msra.mxu0 0
        %982 = vmatprep.subr.bf16.mxu0 0
        %983 = vmatpush1.bf16.msra.mxu0 0
        %984 = vmatprep.subr.bf16.mxu0 0
        %985 = vmatpush1.bf16.msra.mxu0 0
        %986 = vmatprep.subr.bf16.mxu0 0
        %987 = vmatpush1.bf16.msra.mxu0 0
        %988 = vmatprep.subr.bf16.mxu0 0
        %989 = vmatpush1.bf16.msra.mxu0 0
        %990 = vmatprep.subr.bf16.mxu0 0
        %991 = vmatpush1.bf16.msra.mxu0 0
        %992 = vmatprep.subr.bf16.mxu0 0
        %993 = vmatpush1.bf16.msra.mxu0 0
        %994 = vmatprep.subr.bf16.mxu0 %v978
        %995 = vmatpush1.bf16.msra.mxu0 %v975
        %996 = vmatprep.subr.bf16.mxu0 0
        %997 = vmatpush2.bf16.msra.mxu0 0
        %998 = vmatprep.subr.bf16.mxu0 0
        %999 = vmatpush2.bf16.msra.mxu0 0
        %1000 = vmatprep.subr.bf16.mxu0 0
        %1001 = vmatpush2.bf16.msra.mxu0 0
        %1002 = vmatprep.subr.bf16.mxu0 0
        %1003 = vmatpush2.bf16.msra.mxu0 0
        %1004 = vmatprep.subr.bf16.mxu0 0
        %1005 = vmatpush2.bf16.msra.mxu0 0
        %1006 = vmatprep.subr.bf16.mxu0 0
        %1007 = vmatpush2.bf16.msra.mxu0 0
        %1008 = vmatprep.subr.bf16.mxu0 0
        %1009 = vmatpush2.bf16.msra.mxu0 0
        %1010 = vmatprep.subr.bf16.mxu0 0
        %1011 = vmatpush2.bf16.msra.mxu0 0
        %1012 = vmatprep.mubr.bf16.mxu0 0
        %1013 = vmatmul.mubr.bf16.gmra.mxu0 %v972
        %v1014 = vpop.f32.mrf.mxu0
        %v1015 = vadd.f32 0.0, %v1014
        %v1016 = vpop.f32.mrf.mxu0
        %v1017 = vadd.f32 0.0, %v1016
        %v1018 = vpop.f32.mrf.mxu0
        %v1019 = vpop.f32.mrf.mxu0
        %1020 = vdwg.mxu0
        %v1022 = vsel %vm497, %v968, 0
        %1024 = vmatprep.subr.bf16.mxu0 0
        %1025 = vmatpush1.bf16.msra.mxu0 0
        %1026 = vmatprep.subr.bf16.mxu0 0
        %1027 = vmatpush1.bf16.msra.mxu0 0
        %1028 = vmatprep.subr.bf16.mxu0 0
        %1029 = vmatpush1.bf16.msra.mxu0 0
        %1030 = vmatprep.subr.bf16.mxu0 0
        %1031 = vmatpush1.bf16.msra.mxu0 0
        %1032 = vmatprep.subr.bf16.mxu0 0
        %1033 = vmatpush1.bf16.msra.mxu0 0
        %1034 = vmatprep.subr.bf16.mxu0 0
        %1035 = vmatpush1.bf16.msra.mxu0 0
        %1036 = vmatprep.subr.bf16.mxu0 0
        %1037 = vmatpush1.bf16.msra.mxu0 0
        %1038 = vmatprep.subr.bf16.mxu0 %v863
        %1039 = vmatpush1.bf16.msra.mxu0 %v860
        %1040 = vmatprep.subr.bf16.mxu0 0
        %1041 = vmatpush2.bf16.msra.mxu0 0
        %1042 = vmatprep.subr.bf16.mxu0 0
        %1043 = vmatpush2.bf16.msra.mxu0 0
        %1044 = vmatprep.subr.bf16.mxu0 0
        %1045 = vmatpush2.bf16.msra.mxu0 0
        %1046 = vmatprep.subr.bf16.mxu0 0
        %1047 = vmatpush2.bf16.msra.mxu0 0
        %1048 = vmatprep.subr.bf16.mxu0 0
        %1049 = vmatpush2.bf16.msra.mxu0 0
        %1050 = vmatprep.subr.bf16.mxu0 0
        %1051 = vmatpush2.bf16.msra.mxu0 0
        %1052 = vmatprep.subr.bf16.mxu0 0
        %1053 = vmatpush2.bf16.msra.mxu0 0
        %1054 = vmatprep.subr.bf16.mxu0 0
        %1055 = vmatpush2.bf16.msra.mxu0 0
        %1056 = vmatprep.mubr.bf16.mxu0 0
        %1057 = vmatmul.mubr.bf16.gmra.mxu0 %v1022
        %v1058 = vpop.f32.mrf.mxu0
        %v1059 = vadd.f32 %v1015, %v1058
        %v1060 = vpop.f32.mrf.mxu0
        %v1061 = vadd.f32 %v1017, %v1060
        %v1062 = vpop.f32.mrf.mxu0
        %v1063 = vpop.f32.mrf.mxu0
        %1064 = vdwg.mxu0
        %s1065 = scalar_lea.vmem %s8, 24
        %v1066 = vld [vmem:[%s1065] sm:$0xff]
        %1068 = vset.pattern.permute.xlu0 0
        %1069 = vperm.xlu0 %1068, %v1066
        %v1070 = vpop.permute.xlu0 %1069
        %v1072 = vadd.f32 %v1059, %v1070
        %v1073 = vadd.f32 %v1061, %v1070
        %1074 = vst [vmem:[%s459 + $0x30] sm:$0xff] %v1072
        %1075 = vst [vmem:[%s459 + $0x38] sm:$0xff] %v1073
        %v1076 = vld [vmem:[%s403] sm:$0xff]
        %v1077 = vld [vmem:[%s403 + $0x8] sm:$0xff]
        %1078 = vst [vmem:[%s459 + $0x40] sm:$0xff] %v1076
        %1079 = vst [vmem:[%s459 + $0x48] sm:$0xff] %v1077
        %s1080 = sand.u32 %s262, 1
        %s1081 = scalar_lea.sflag [#allocation4], %s1080
        %s1082 = sand.u32 %s262, 1
        %s1083 = smul.addr %s1082, 80
        %s1084 = scalar_lea.vmem [#allocation10], %s1083
        // Predicated region
        $region73: #{tpu_custom_call.1} parent=55 // pred_check
          %p1085 = pneg %p272
        $region74: #{tpu_custom_call.1} parent=55 // pred_check_branch
          %1087 = sbr.rel (%p1085) target = $region76
        $region75: #{tpu_custom_call.1} parent=55 // pred_region
          %s1088 = smul.u32 2, %s35
          %s1090 = ssub.s32 1280, 1280
          %1091 = vsyncadd %s1081, %s1090
          %s1092 = smul.addr %s34, 10
          %s1093 = sadd.s32 %s1088, %s1092
          %s1094 = smul.addr %s1093, 128
          %s1095 = scalar_lea.hbm %s9, %s1094
          %s1096 = sshll.u32 %s1084, 4
          %s1097 = int_to_ptr.vmem [resolvable:$true] %s1096
          %1102 = dma.vmem_to_hbm [thread:$0]  %s1097, 1280, %s1095, %s1081, 256, 256, 16
        $region76: #{tpu_custom_call.1} parent=55 // pred_fallthru
          _
      $region56: #{tpu_custom_call.1} parent=5 // pred_fallthru
        _
      %p1103 = scmp.le.s32.totalorder 2, %s25
      // Predicated region
      $region77: #{tpu_custom_call.1} parent=5 // pred_check
        %p1104 = pneg %p1103
      $region78: #{tpu_custom_call.1} parent=5 // pred_check_branch
        %1106 = sbr.rel (%p1104) target = $region80
      $region79: #{tpu_custom_call.1} parent=5 // pred_region
        %s1107 = ssub.s32 %s25, 2
        // Predicated region
        $region81: #{tpu_custom_call.1} parent=79 // pred_check
          %p1108 = pneg %p278
        $region82: #{tpu_custom_call.1} parent=79 // pred_check_branch
          %1110 = sbr.rel (%p1108) target = $region84
        $region83: #{tpu_custom_call.1} parent=79 // pred_region
          %s1111 = sand.u32 %s263, 1
          %s1112 = scalar_lea.sflag [#allocation4], %s1111
          %s1113 = sand.u32 %s263, 1
          %s1114 = smul.addr %s1113, 80
          %s1115 = scalar_lea.vmem [#allocation10], %s1114
          %1116 = dma.done %s1112, 1280
        $region84: #{tpu_custom_call.1} parent=79 // pred_fallthru
          _
      $region80: #{tpu_custom_call.1} parent=5 // pred_fallthru
        _
    $region6: #{tpu_custom_call.1} parent=1 // loop_footer
      %s29 = sadd.s32 1, %s25
    $region7: #{tpu_custom_call.1} parent=1 // loop_footer_branch
      %24 = sbr.rel target = $region3
    $region8: #{tpu_custom_call.1} parent=1 // loop_exit
      _
    %1117 = vsyncpa [#allocation3], 1
    %s1118 = scalar_lea.sflag [#allocation3], 1
    %1119 = vsyncpa %s1118, 1
    %1120 = vsyncpa [#allocation6], 1
    %s1121 = scalar_lea.sflag [#allocation6], 1
    %1122 = vsyncpa %s1121, 1
    %1123 = vsyncpa [#allocation9], 1
    %1124 = vsyncpa [#allocation4], 1
    %s1125 = scalar_lea.sflag [#allocation4], 1
    %1126 = vsyncpa %s1125, 1

</llo_original>
